<compile_context>
chip_gen: v7x
topology: tpu7x:2x2x1
jax: 0.10.0
libtpu: 0.0.40
codegen_flags: <defaults>
</compile_context>

<pallas_src>
from functools import partial

import jax
import jax.numpy as jnp
import numpy as np
from jax.experimental import pallas as pl
from jax.experimental.pallas import tpu as pltpu

_LANE = 128                   # TPU lane width
_MIN_PALLAS_ELEMS = 1 << 20   # crossover vs fused-XLA path
# TODO(synk): measure the true Pallas-vs-XLA crossover instead of guessing 2^20.


def _cdiv(a, b):
    return (a + b - 1) // b


def _round_up(x, m):
    return ((x + m - 1) // m) * m


def _weighted_l1_ref(inputs, target, code_weights=None, weights=None):
    """Pure-JAX forward (exact semantics); also the small-shape fast path."""
    target = jnp.where(jnp.isnan(target), inputs, target)
    diff = inputs - target
    if code_weights is not None:
        diff = diff * code_weights.reshape(1, 1, -1)
    loss = jnp.abs(diff)
    if weights is not None:
        loss = loss * weights[..., None]
    return loss


def _expansion_matrix(num_codes):
    """(128, 128*C) 0/1 f32 matrix E with E[i, j] = (j // C == i).

    (rows, 128) @ E == per-anchor weights repeated C times along the lanes,
    i.e. the anchor-weight broadcast done on the MXU instead of in HBM.
    """
    j = np.arange(_LANE * num_codes)
    i = np.arange(_LANE)
    rep = (j[None, :] // num_codes == i[:, None]).astype(np.float32)
    return jnp.asarray(rep)


def _wl1_kernel_weighted(x_ref, t_ref, cw_ref, w_ref, rep_ref, o_ref, *, splits):
    # x_ref/t_ref/o_ref : (tR, 128*C)  lane-dense tiles
    # cw_ref            : (1, 128*C)   resident tiled code weights (f32)
    # w_ref             : (tR, 128)    compact per-anchor weights
    # rep_ref           : (128, 128*C) resident 0/1 expansion matrix (f32)
    x = x_ref[...].astype(jnp.float32)
    t = t_ref[...].astype(jnp.float32)
    t = jnp.where(jnp.isnan(t), x, t)
    loss = jnp.abs((x - t) * cw_ref[...])           # code weights broadcast on lanes

    # Expand per-anchor weights to per-lane weights on the (idle) MXU.
    w = w_ref[...].astype(jnp.float32)              # (tR, 128)
    rep = rep_ref[...]
    dot = lambda a: jnp.dot(a, rep, preferred_element_type=jnp.float32)
    if splits == 1:
        # weights already bf16-exact (or caller accepts bf16-pass rounding).
        w_exp = dot(w)
    else:
        # 3-way bf16-exact split -> exact f32 expansion regardless of how the
        # f32 matmul is decomposed into MXU passes.
        w1 = w.astype(jnp.bfloat16).astype(jnp.float32)
        r1 = w - w1
        w2 = r1.astype(jnp.bfloat16).astype(jnp.float32)
        w3 = r1 - w2
        w_exp = (dot(w1) + dot(w2)) + dot(w3)       # (tR, 128*C)

    o_ref[...] = (loss * w_exp).astype(o_ref.dtype)


def _wl1_kernel_unweighted(x_ref, t_ref, cw_ref, o_ref):
    # Default-weights path: no ones array streamed from HBM, no MXU expansion.
    x = x_ref[...].astype(jnp.float32)
    t = t_ref[...].astype(jnp.float32)
    t = jnp.where(jnp.isnan(t), x, t)
    o_ref[...] = jnp.abs((x - t) * cw_ref[...]).astype(o_ref.dtype)


def weighted_l1_loss(inputs, target, code_weights=None, weights=None, *,
                     block_rows=512, exact_weight_expansion=True,
                     min_pallas_elems=_MIN_PALLAS_ELEMS):
    """WeightedL1Loss.forward: (B, A, C) element-wise weighted L1, no reduction.

    block_rows: anchor-rows (of 128 anchors each) per tile.  512 keeps the
    double-buffered tiles + expansion intermediates well inside v7x's 64 MiB
    physical VMEM; on v6e (128 MiB) ~1024 is an optional ~1-3% sweep.
    """
    B, A, C = inputs.shape
    assert target.shape == (B, A, C)
    if weights is not None:
        assert weights.shape[0] == B and weights.shape[1] == A

    # Tiny or layout-unfriendly problems: let XLA fuse the elementwise expr.
    # TODO(synk): add a pad/mask path so A % 128 != 0 also uses the Pallas kernel.
    if (A % _LANE != 0) or (B * A * C < min_pallas_elems):
        return _weighted_l1_ref(inputs, target, code_weights, weights)

    # Output dtype follows the reference's promotion semantics.
    out_dtype = jnp.result_type(inputs.dtype, target.dtype)
    if code_weights is not None:
        out_dtype = jnp.promote_types(out_dtype, code_weights.dtype)
    if weights is not None:
        out_dtype = jnp.promote_types(out_dtype, weights.dtype)

    R = A // _LANE               # anchor "rows" of 128 anchors each
    N = B * R                    # flattened row axis (spans batch boundaries)
    LW = _LANE * C               # lane width per row: multiple of 128

    # Balanced tiling over the flattened row axis; even tile count so v7x's
    # two TensorCores split a purely bandwidth-bound grid evenly.
    if N <= block_rows:
        t_rows, n_tiles = N, 1
    else:
        n_tiles = _cdiv(N, block_rows)
        if n_tiles % 2 == 1:
            n_tiles += 1
        t_rows = min(_round_up(_cdiv(N, n_tiles), 8), block_rows)
        n_tiles = _cdiv(N, t_rows)

    x2 = inputs.reshape(N, LW)                       # free contiguous regroup
    t2 = target.reshape(N, LW)
    cw = jnp.ones((C,), jnp.float32) if code_weights is None \
        else code_weights.astype(jnp.float32)
    cw_row = jnp.tile(cw, _LANE).reshape(1, LW)      # resident (1, 128*C)

    data_spec = pl.BlockSpec((t_rows, LW), lambda i: (i, 0))
    # TODO(synk): single-buffer the resident operands (pipeline_mode=pl.Buffered(1))
    # once verified on the target JAX version; saves ~0.9 MiB of dead VMEM.
    cw_spec = pl.BlockSpec((1, LW), lambda i: (0, 0))

    compiler_params = pltpu.CompilerParams(
        # Purely HBM-bound elementwise op; the single flattened grid axis is
        # fully independent, so v7x's 2 TensorCores split it.
        dimension_semantics=("parallel",),
        # ~12 MiB of double-buffered tiles at block_rows=512 plus a few MiB of
        # f32 expansion intermediates; 40 MiB is safe on v5e/v6e (128 MiB
        # physical) and v7x (64 MiB physical).
        vmem_limit_bytes=40 * 1024 * 1024,
    )

    if weights is None:
        out2 = pl.pallas_call(
            _wl1_kernel_unweighted,
            out_shape=jax.ShapeDtypeStruct((N, LW), out_dtype),
            grid_spec=pltpu.PrefetchScalarGridSpec(
                num_scalar_prefetch=0,
                grid=(n_tiles,),
                in_specs=[data_spec, data_spec, cw_spec],
                out_specs=data_spec,
            ),
            compiler_params=compiler_params,
        )(x2, t2, cw_row)
    else:
        w2 = weights.reshape(N, _LANE)               # compact, native dtype
        rep = _expansion_matrix(C)                   # resident (128, 128*C)
        splits = 1 if (weights.dtype == jnp.bfloat16 or not exact_weight_expansion) else 3
        out2 = pl.pallas_call(
            partial(_wl1_kernel_weighted, splits=splits),
            out_shape=jax.ShapeDtypeStruct((N, LW), out_dtype),
            grid_spec=pltpu.PrefetchScalarGridSpec(
                num_scalar_prefetch=0,
                grid=(n_tiles,),
                in_specs=[
                    data_spec,                                        # inputs
                    data_spec,                                        # target
                    cw_spec,                                          # code weights (resident)
                    pl.BlockSpec((t_rows, _LANE), lambda i: (i, 0)),  # anchor weights (compact)
                    pl.BlockSpec((_LANE, LW), lambda i: (0, 0)),      # expansion matrix (resident)
                ],
                out_specs=data_spec,
            ),
            compiler_params=compiler_params,
        )(x2, t2, cw_row, w2, rep)

    # TODO(synk): opt-in fused-reduction variant (sum over codes/anchors in-kernel)
    # would cut ~1/3 of HBM traffic for the typical pcdet call pattern.
    return out2.reshape(B, A, C)


if __name__ == "__main__":
    key = jax.random.PRNGKey(0)
    C = 7  # box code size (x, y, z, dx, dy, dz, heading)
    cw = jnp.asarray(np.linspace(0.5, 2.0, C, dtype=np.float32))

    def check(out, ref, rtol=1e-5, atol=1e-6):
        np.testing.assert_allclose(np.asarray(out), np.asarray(ref), rtol=rtol, atol=atol)

    # --- small shape, forced onto the Pallas path: single balanced tile ---
    B, A = 2, 2048
    k1, k2, k3 = jax.random.split(key, 3)
    x = jax.random.normal(k1, (B, A, C), dtype=jnp.float32)
    t = jax.random.normal(k2, (B, A, C), dtype=jnp.float32)
    t = t.at[0, 0, 0].set(jnp.nan)          # exercise the isnan path
    t = t.at[1, 1234, 3].set(jnp.nan)
    w = jax.random.uniform(k3, (B, A), dtype=jnp.float32)

    out = jax.block_until_ready(weighted_l1_loss(x, t, cw, w, min_pallas_elems=0))
    check(out, _weighted_l1_ref(x, t, cw, w))
    assert out.shape == (B, A, C) and out.dtype == jnp.float32

    # --- multi-tile balanced grid (small block_rows to force several tiles) ---
    B2, A2 = 2, 3072
    x2 = jax.random.normal(k1, (B2, A2, C), dtype=jnp.float32)
    t2 = jax.random.normal(k2, (B2, A2, C), dtype=jnp.float32)
    w2 = jax.random.uniform(k3, (B2, A2), dtype=jnp.float32)
    out2 = jax.block_until_ready(
        weighted_l1_loss(x2, t2, cw, w2, block_rows=8, min_pallas_elems=0))
    check(out2, _weighted_l1_ref(x2, t2, cw, w2))

    # --- default weights / code_weights: minimal kernel, no MXU expansion ---
    out3 = jax.block_until_ready(weighted_l1_loss(x, t, min_pallas_elems=0))
    check(out3, _weighted_l1_ref(x, t))

    # --- bf16-exact weights: single-dot expansion path ---
    wb = w.astype(jnp.bfloat16)
    out4 = jax.block_until_ready(weighted_l1_loss(x, t, cw, wb, min_pallas_elems=0))
    check(out4, _weighted_l1_ref(x, t, cw, wb))

    # --- realistic pcdet-sized shape through the default dispatcher ---
    B3, A3 = 4, 65536
    x3 = jax.random.normal(k1, (B3, A3, C), dtype=jnp.float32)
    t3 = jax.random.normal(k2, (B3, A3, C), dtype=jnp.float32)
    t3 = t3.at[2, 54321, 5].set(jnp.nan)
    w3 = jax.random.uniform(k3, (B3, A3), dtype=jnp.float32)
    out5 = jax.block_until_ready(weighted_l1_loss(x3, t3, cw, w3))
    check(out5, _weighted_l1_ref(x3, t3, cw, w3))

    # --- tiny shape dispatches to the fused-XLA path ---
    Bs, As = 2, 16
    s_in = jax.random.normal(k1, (Bs, As, C), dtype=jnp.float32)
    s_tg = jax.random.normal(k2, (Bs, As, C), dtype=jnp.float32)
    s_w = jax.random.uniform(k3, (Bs, As), dtype=jnp.float32)
    out_s = jax.block_until_ready(weighted_l1_loss(s_in, s_tg, cw, s_w))
    check(out_s, _weighted_l1_ref(s_in, s_tg, cw, s_w), rtol=1e-6)

    print("KERNEL_OK")
</pallas_src>

<mosaic_0001>
module attributes {stable_mosaic.version = 11 : i64} {
  func.func @_wl1_kernel_weighted(%arg0: i32, %arg1: memref<32x896xf32, #tpu.memory_space<vmem>>, %arg2: memref<32x896xf32, #tpu.memory_space<vmem>>, %arg3: memref<1x896xf32, #tpu.memory_space<vmem>>, %arg4: memref<32x128xf32, #tpu.memory_space<vmem>>, %arg5: memref<128x896xf32, #tpu.memory_space<vmem>>, %arg6: memref<32x896xf32, #tpu.memory_space<vmem>>) attributes {dimension_semantics = [#tpu.dimension_semantics<parallel>], iteration_bounds = array<i64: 1>, scalar_prefetch = 0 : i64, scratch_operands = 0 : i64, tpu.core_type = #tpu.core_type<tc>, window_params = [{transform_indices = @transform_0, window_bounds = array<i64: 32, 896>}, {transform_indices = @transform_1, window_bounds = array<i64: 32, 896>}, {pipeline_mode = #tpu.pipeline_mode<synchronous>, transform_indices = @transform_2, window_bounds = array<i64: 1, 896>}, {transform_indices = @transform_3, window_bounds = array<i64: 32, 128>}, {pipeline_mode = #tpu.pipeline_mode<synchronous>, transform_indices = @transform_4, window_bounds = array<i64: 128, 896>}, {transform_indices = @transform_5, window_bounds = array<i64: 32, 896>}]} {
    %c0 = arith.constant 0 : index
    %c0_0 = arith.constant 0 : index
    %0 = vector.load %arg1[%c0, %c0_0] : memref<32x896xf32, #tpu.memory_space<vmem>>, vector<32x896xf32>
    %c0_1 = arith.constant 0 : index
    %c0_2 = arith.constant 0 : index
    %1 = vector.load %arg2[%c0_1, %c0_2] : memref<32x896xf32, #tpu.memory_space<vmem>>, vector<32x896xf32>
    %2 = arith.cmpf one, %1, %1 : vector<32x896xf32>
    %3 = arith.select %2, %0, %1 : vector<32x896xi1>, vector<32x896xf32>
    %4 = arith.subf %0, %3 : vector<32x896xf32>
    %c0_3 = arith.constant 0 : index
    %c0_4 = arith.constant 0 : index
    %5 = vector.load %arg3[%c0_3, %c0_4] : memref<1x896xf32, #tpu.memory_space<vmem>>, vector<1x896xf32>
    %6 = vector.broadcast %5 : vector<1x896xf32> to vector<32x896xf32>
    %7 = arith.mulf %4, %6 : vector<32x896xf32>
    %8 = math.absf %7 : vector<32x896xf32>
    %c0_5 = arith.constant 0 : index
    %c0_6 = arith.constant 0 : index
    %9 = vector.load %arg4[%c0_5, %c0_6] : memref<32x128xf32, #tpu.memory_space<vmem>>, vector<32x128xf32>
    %c0_7 = arith.constant 0 : index
    %c0_8 = arith.constant 0 : index
    %10 = vector.load %arg5[%c0_7, %c0_8] : memref<128x896xf32, #tpu.memory_space<vmem>>, vector<128x896xf32>
    %11 = arith.truncf %9 : vector<32x128xf32> to vector<32x128xbf16>
    %12 = arith.extf %11 : vector<32x128xbf16> to vector<32x128xf32>
    %13 = arith.subf %9, %12 : vector<32x128xf32>
    %14 = arith.truncf %13 : vector<32x128xf32> to vector<32x128xbf16>
    %15 = arith.extf %14 : vector<32x128xbf16> to vector<32x128xf32>
    %16 = arith.subf %13, %15 : vector<32x128xf32>
    %cst = arith.constant dense<0.000000e+00> : vector<32x896xf32>
    %17 = tpu.matmul %12, %10, %cst {dimension_numbers = #tpu.dot_dimension_numbers<[1], [0], [0], [1], [0, 0, 1, 1], [], []>} : vector<32x128xf32>, vector<128x896xf32>, vector<32x896xf32> -> vector<32x896xf32>
    %cst_9 = arith.constant dense<0.000000e+00> : vector<32x896xf32>
    %18 = tpu.matmul %15, %10, %cst_9 {dimension_numbers = #tpu.dot_dimension_numbers<[1], [0], [0], [1], [0, 0, 1, 1], [], []>} : vector<32x128xf32>, vector<128x896xf32>, vector<32x896xf32> -> vector<32x896xf32>
    %19 = arith.addf %17, %18 : vector<32x896xf32>
    %cst_10 = arith.constant dense<0.000000e+00> : vector<32x896xf32>
    %20 = tpu.matmul %16, %10, %cst_10 {dimension_numbers = #tpu.dot_dimension_numbers<[1], [0], [0], [1], [0, 0, 1, 1], [], []>} : vector<32x128xf32>, vector<128x896xf32>, vector<32x896xf32> -> vector<32x896xf32>
    %21 = arith.addf %19, %20 : vector<32x896xf32>
    %22 = arith.mulf %8, %21 : vector<32x896xf32>
    %c0_11 = arith.constant 0 : index
    %c0_12 = arith.constant 0 : index
    %23 = vector.load %arg6[%c0_11, %c0_12] : memref<32x896xf32, #tpu.memory_space<vmem>>, vector<32x896xf32>
    tpu.vector_store %arg6[%c0_11, %c0_12], %22 {strides = array<i32>} : memref<32x896xf32, #tpu.memory_space<vmem>>, vector<32x896xf32>,
    return
  }
  func.func @transform_0(%arg0: i32) -> (i32, i32) {
    %c0_i32 = arith.constant 0 : i32
    %c0_i32_0 = arith.constant 0 : i32
    return %arg0, %c0_i32 : i32, i32
  }
  func.func @transform_1(%arg0: i32) -> (i32, i32) {
    %c0_i32 = arith.constant 0 : i32
    %c0_i32_0 = arith.constant 0 : i32
    return %arg0, %c0_i32 : i32, i32
  }
  func.func @transform_2(%arg0: i32) -> (i32, i32) {
    %c0_i32 = arith.constant 0 : i32
    %c0_i32_0 = arith.constant 0 : i32
    %c0_i32_1 = arith.constant 0 : i32
    return %c0_i32, %c0_i32_0 : i32, i32
  }
  func.func @transform_3(%arg0: i32) -> (i32, i32) {
    %c0_i32 = arith.constant 0 : i32
    %c0_i32_0 = arith.constant 0 : i32
    return %arg0, %c0_i32 : i32, i32
  }
  func.func @transform_4(%arg0: i32) -> (i32, i32) {
    %c0_i32 = arith.constant 0 : i32
    %c0_i32_0 = arith.constant 0 : i32
    %c0_i32_1 = arith.constant 0 : i32
    return %c0_i32, %c0_i32_0 : i32, i32
  }
  func.func @transform_5(%arg0: i32) -> (i32, i32) {
    %c0_i32 = arith.constant 0 : i32
    %c0_i32_0 = arith.constant 0 : i32
    return %arg0, %c0_i32 : i32, i32
  }
}

</mosaic_0001>

<llo_original>
// kernel: tpu_custom_call.1
$region0: #{tpu_custom_call.1}
  #allocation0 [shape = 'u32[]', space=smem, size = 0x4, offset = 0x4, fixed_abs, tag = 'smem constant byte address 0x4 - core index']
  #allocation1 [shape = 'u32[144,128]{1,0:T(1,128)}', space=vmem, size = 0x12000, scoped, tag = 'internal scratch']
  %s0 = inlined_call_operand.hbm [shape: f32[32,896], index: 0, kind: input, shape index: {}]
  %s1 = inlined_call_operand.hbm [shape: f32[32,896], index: 1, kind: input, shape index: {}]
  %s2 = inlined_call_operand.vmem [shape: f32[1,896], index: 2, kind: input, shape index: {}]
  %s3 = inlined_call_operand.hbm [shape: f32[32,128], index: 3, kind: input, shape index: {}]
  %s4 = inlined_call_operand.hbm [shape: f32[128,896], index: 4, kind: input, shape index: {}]
  %s5 = inlined_call_operand.hbm [shape: f32[32,896], index: 5, kind: output, shape index: {}]
  %s6 = sld [smem:[#allocation0]]
  $region46: #{tpu_custom_call.1} parent=0
    _
  %s8 = ssub.s32 1, %s6
  %s9 = scalar_select 0, %s8, %s6
  $region1: #{tpu_custom_call.1} parent=0
    #allocation2 [shape = 'u8[114688]{0}', space=vmem, size = 0x1c000, scoped, tag = 'input window, operand 0, single buffered']
    #allocation3 [shape = 's32[1]{0}', space=sflag, size = 0x4, scoped, tag = 'scoped memory for tpu_custom_call.1']
    #allocation4 [shape = 's32[1]{0}', space=sflag, size = 0x4, scoped, tag = 'scoped memory for tpu_custom_call.1']
    #allocation5 [shape = 'u8[114688]{0}', space=vmem, size = 0x1c000, scoped, tag = 'input window, operand 1, single buffered']
    #allocation6 [shape = 's32[1]{0}', space=sflag, size = 0x4, scoped, tag = 'scoped memory for tpu_custom_call.1']
    #allocation7 [shape = 'u8[16384]{0}', space=vmem, size = 0x4000, scoped, tag = 'input window, operand 3, single buffered']
    #allocation8 [shape = 'u8[458752]{0}', space=vmem, size = 0x70000, scoped, tag = 'input window, operand 4, single buffered']
    #allocation9 [shape = 's32[1]{0}', space=sflag, size = 0x4, scoped, tag = 'scoped memory for tpu_custom_call.1']
    #allocation10 [shape = 'u8[114688]{0}', space=vmem, size = 0x1c000, scoped, tag = 'output window, operand 0, single buffered']
    %10 = vsyncpa [#allocation3], 0
    %11 = vsyncpa [#allocation6], 0
    %12 = vsyncpa [#allocation9], 0
    %13 = vsyncpa [#allocation4], 0
    // Predicated region
    $region2: #{tpu_custom_call.1} parent=1 // pred_check
      _
    $region3: #{tpu_custom_call.1} parent=1 // pred_check_branch
      %15 = sbr.rel (0) target = $region5
    $region4: #{tpu_custom_call.1} parent=1 // pred_region
      %s17 = ssub.s32 3584, 3584
      %18 = vsyncadd [#allocation3], %s17
      %s19 = sshll.u32 [#allocation2], 4
      %s20 = int_to_ptr.vmem [resolvable:$true] %s19
      %25 = dma.hbm_to_vmem [thread:$0]  %s0, 3584, %s20, [#allocation3], 896, 896, 56
    $region5: #{tpu_custom_call.1} parent=1 // pred_fallthru
      _
    // Predicated region
    $region6: #{tpu_custom_call.1} parent=1 // pred_check
      _
    $region7: #{tpu_custom_call.1} parent=1 // pred_check_branch
      %27 = sbr.rel (0) target = $region9
    $region8: #{tpu_custom_call.1} parent=1 // pred_region
      %s29 = ssub.s32 3584, 3584
      %30 = vsyncadd [#allocation6], %s29
      %s31 = sshll.u32 [#allocation5], 4
      %s32 = int_to_ptr.vmem [resolvable:$true] %s31
      %37 = dma.hbm_to_vmem [thread:$0]  %s1, 3584, %s32, [#allocation6], 896, 896, 56
    $region9: #{tpu_custom_call.1} parent=1 // pred_fallthru
      _
    // Predicated region
    $region10: #{tpu_custom_call.1} parent=1 // pred_check
      _
    $region11: #{tpu_custom_call.1} parent=1 // pred_check_branch
      %39 = sbr.rel (0) target = $region13
    $region12: #{tpu_custom_call.1} parent=1 // pred_region
      _
    $region13: #{tpu_custom_call.1} parent=1 // pred_fallthru
      _
    // Predicated region
    $region14: #{tpu_custom_call.1} parent=1 // pred_check
      _
    $region15: #{tpu_custom_call.1} parent=1 // pred_check_branch
      %41 = sbr.rel (0) target = $region17
    $region16: #{tpu_custom_call.1} parent=1 // pred_region
      %s43 = ssub.s32 512, 512
      %44 = vsyncadd [#allocation6], %s43
      %s45 = sshll.u32 [#allocation7], 4
      %s46 = int_to_ptr.vmem [resolvable:$true] %s45
      %51 = dma.hbm_to_vmem [thread:$0]  %s3, 512, %s46, [#allocation6], 128, 128, 8
    $region17: #{tpu_custom_call.1} parent=1 // pred_fallthru
      _
    // Predicated region
    $region18: #{tpu_custom_call.1} parent=1 // pred_check
      _
    $region19: #{tpu_custom_call.1} parent=1 // pred_check_branch
      %53 = sbr.rel (0) target = $region21
    $region20: #{tpu_custom_call.1} parent=1 // pred_region
      %s55 = ssub.s32 14336, 14336
      %56 = vsyncadd [#allocation9], %s55
      %s57 = sshll.u32 [#allocation8], 4
      %s58 = int_to_ptr.vmem [resolvable:$true] %s57
      %63 = dma.hbm_to_vmem [thread:$0]  %s4, 14336, %s58, [#allocation9], 896, 896, 56
    $region21: #{tpu_custom_call.1} parent=1 // pred_fallthru
      _
    // Predicated region
    $region22: #{tpu_custom_call.1} parent=1 // pred_check
      _
    $region23: #{tpu_custom_call.1} parent=1 // pred_check_branch
      %65 = sbr.rel (0) target = $region25
    $region24: #{tpu_custom_call.1} parent=1 // pred_region
      %66 = dma.done [#allocation3], 3584
    $region25: #{tpu_custom_call.1} parent=1 // pred_fallthru
      _
    // Predicated region
    $region26: #{tpu_custom_call.1} parent=1 // pred_check
      _
    $region27: #{tpu_custom_call.1} parent=1 // pred_check_branch
      %68 = sbr.rel (0) target = $region29
    $region28: #{tpu_custom_call.1} parent=1 // pred_region
      %69 = dma.done [#allocation6], 3584
    $region29: #{tpu_custom_call.1} parent=1 // pred_fallthru
      _
    // Predicated region
    $region30: #{tpu_custom_call.1} parent=1 // pred_check
      _
    $region31: #{tpu_custom_call.1} parent=1 // pred_check_branch
      %71 = sbr.rel (0) target = $region33
    $region32: #{tpu_custom_call.1} parent=1 // pred_region
      %72 = dma.done [#allocation6], 512
    $region33: #{tpu_custom_call.1} parent=1 // pred_fallthru
      _
    // Predicated region
    $region34: #{tpu_custom_call.1} parent=1 // pred_check
      _
    $region35: #{tpu_custom_call.1} parent=1 // pred_check_branch
      %74 = sbr.rel (0) target = $region37
    $region36: #{tpu_custom_call.1} parent=1 // pred_region
      %75 = dma.done [#allocation9], 14336
    $region37: #{tpu_custom_call.1} parent=1 // pred_fallthru
      _
    %v76 = vld [vmem:[#allocation2] sm:$0xff]
    %v77 = vld [vmem:[#allocation2 + $0x8] sm:$0xff]
    %v78 = vld [vmem:[#allocation2 + $0x10] sm:$0xff]
    %v79 = vld [vmem:[#allocation2 + $0x18] sm:$0xff]
    %v80 = vld [vmem:[#allocation2 + $0x20] sm:$0xff]
    %v81 = vld [vmem:[#allocation2 + $0x28] sm:$0xff]
    %v82 = vld [vmem:[#allocation2 + $0x30] sm:$0xff]
    %v83 = vld [vmem:[#allocation2 + $0x38] sm:$0xff]
    %v84 = vld [vmem:[#allocation2 + $0x40] sm:$0xff]
    %v85 = vld [vmem:[#allocation2 + $0x48] sm:$0xff]
    %v86 = vld [vmem:[#allocation2 + $0x50] sm:$0xff]
    %v87 = vld [vmem:[#allocation2 + $0x58] sm:$0xff]
    %v88 = vld [vmem:[#allocation2 + $0x60] sm:$0xff]
    %v89 = vld [vmem:[#allocation2 + $0x68] sm:$0xff]
    %v90 = vld [vmem:[#allocation2 + $0x70] sm:$0xff]
    %v91 = vld [vmem:[#allocation2 + $0x78] sm:$0xff]
    %v92 = vld [vmem:[#allocation2 + $0x80] sm:$0xff]
    %v93 = vld [vmem:[#allocation2 + $0x88] sm:$0xff]
    %v94 = vld [vmem:[#allocation2 + $0x90] sm:$0xff]
    %v95 = vld [vmem:[#allocation2 + $0x98] sm:$0xff]
    %v96 = vld [vmem:[#allocation2 + $0xa0] sm:$0xff]
    %v97 = vld [vmem:[#allocation2 + $0xa8] sm:$0xff]
    %v98 = vld [vmem:[#allocation2 + $0xb0] sm:$0xff]
    %v99 = vld [vmem:[#allocation2 + $0xb8] sm:$0xff]
    %v100 = vld [vmem:[#allocation2 + $0xc0] sm:$0xff]
    %v101 = vld [vmem:[#allocation2 + $0xc8] sm:$0xff]
    %v102 = vld [vmem:[#allocation2 + $0xd0] sm:$0xff]
    %v103 = vld [vmem:[#allocation2 + $0xd8] sm:$0xff]
    %v104 = vld [vmem:[#allocation5] sm:$0xff]
    %v105 = vld [vmem:[#allocation5 + $0x8] sm:$0xff]
    %v106 = vld [vmem:[#allocation5 + $0x10] sm:$0xff]
    %v107 = vld [vmem:[#allocation5 + $0x18] sm:$0xff]
    %v108 = vld [vmem:[#allocation5 + $0x20] sm:$0xff]
    %v109 = vld [vmem:[#allocation5 + $0x28] sm:$0xff]
    %v110 = vld [vmem:[#allocation5 + $0x30] sm:$0xff]
    %v111 = vld [vmem:[#allocation5 + $0x38] sm:$0xff]
    %v112 = vld [vmem:[#allocation5 + $0x40] sm:$0xff]
    %v113 = vld [vmem:[#allocation5 + $0x48] sm:$0xff]
    %v114 = vld [vmem:[#allocation5 + $0x50] sm:$0xff]
    %v115 = vld [vmem:[#allocation5 + $0x58] sm:$0xff]
    %v116 = vld [vmem:[#allocation5 + $0x60] sm:$0xff]
    %v117 = vld [vmem:[#allocation5 + $0x68] sm:$0xff]
    %v118 = vld [vmem:[#allocation5 + $0x70] sm:$0xff]
    %v119 = vld [vmem:[#allocation5 + $0x78] sm:$0xff]
    %v120 = vld [vmem:[#allocation5 + $0x80] sm:$0xff]
    %v121 = vld [vmem:[#allocation5 + $0x88] sm:$0xff]
    %v122 = vld [vmem:[#allocation5 + $0x90] sm:$0xff]
    %v123 = vld [vmem:[#allocation5 + $0x98] sm:$0xff]
    %v124 = vld [vmem:[#allocation5 + $0xa0] sm:$0xff]
    %v125 = vld [vmem:[#allocation5 + $0xa8] sm:$0xff]
    %v126 = vld [vmem:[#allocation5 + $0xb0] sm:$0xff]
    %v127 = vld [vmem:[#allocation5 + $0xb8] sm:$0xff]
    %v128 = vld [vmem:[#allocation5 + $0xc0] sm:$0xff]
    %v129 = vld [vmem:[#allocation5 + $0xc8] sm:$0xff]
    %v130 = vld [vmem:[#allocation5 + $0xd0] sm:$0xff]
    %v131 = vld [vmem:[#allocation5 + $0xd8] sm:$0xff]
    %vm132 = vcmp.ne.f32.partialorder %v104, %v104
    %vm133 = vcmp.ne.f32.partialorder %v105, %v105
    %vm134 = vcmp.ne.f32.partialorder %v106, %v106
    %vm135 = vcmp.ne.f32.partialorder %v107, %v107
    %vm136 = vcmp.ne.f32.partialorder %v108, %v108
    %vm137 = vcmp.ne.f32.partialorder %v109, %v109
    %vm138 = vcmp.ne.f32.partialorder %v110, %v110
    %vm139 = vcmp.ne.f32.partialorder %v111, %v111
    %vm140 = vcmp.ne.f32.partialorder %v112, %v112
    %vm141 = vcmp.ne.f32.partialorder %v113, %v113
    %vm142 = vcmp.ne.f32.partialorder %v114, %v114
    %vm143 = vcmp.ne.f32.partialorder %v115, %v115
    %vm144 = vcmp.ne.f32.partialorder %v116, %v116
    %vm145 = vcmp.ne.f32.partialorder %v117, %v117
    %vm146 = vcmp.ne.f32.partialorder %v118, %v118
    %vm147 = vcmp.ne.f32.partialorder %v119, %v119
    %vm148 = vcmp.ne.f32.partialorder %v120, %v120
    %vm149 = vcmp.ne.f32.partialorder %v121, %v121
    %vm150 = vcmp.ne.f32.partialorder %v122, %v122
    %vm151 = vcmp.ne.f32.partialorder %v123, %v123
    %vm152 = vcmp.ne.f32.partialorder %v124, %v124
    %vm153 = vcmp.ne.f32.partialorder %v125, %v125
    %vm154 = vcmp.ne.f32.partialorder %v126, %v126
    %vm155 = vcmp.ne.f32.partialorder %v127, %v127
    %vm156 = vcmp.ne.f32.partialorder %v128, %v128
    %vm157 = vcmp.ne.f32.partialorder %v129, %v129
    %vm158 = vcmp.ne.f32.partialorder %v130, %v130
    %vm159 = vcmp.ne.f32.partialorder %v131, %v131
    %v160 = vsel %vm132, %v76, %v104
    %v161 = vsel %vm133, %v77, %v105
    %v162 = vsel %vm134, %v78, %v106
    %v163 = vsel %vm135, %v79, %v107
    %v164 = vsel %vm136, %v80, %v108
    %v165 = vsel %vm137, %v81, %v109
    %v166 = vsel %vm138, %v82, %v110
    %v167 = vsel %vm139, %v83, %v111
    %v168 = vsel %vm140, %v84, %v112
    %v169 = vsel %vm141, %v85, %v113
    %v170 = vsel %vm142, %v86, %v114
    %v171 = vsel %vm143, %v87, %v115
    %v172 = vsel %vm144, %v88, %v116
    %v173 = vsel %vm145, %v89, %v117
    %v174 = vsel %vm146, %v90, %v118
    %v175 = vsel %vm147, %v91, %v119
    %v176 = vsel %vm148, %v92, %v120
    %v177 = vsel %vm149, %v93, %v121
    %v178 = vsel %vm150, %v94, %v122
    %v179 = vsel %vm151, %v95, %v123
    %v180 = vsel %vm152, %v96, %v124
    %v181 = vsel %vm153, %v97, %v125
    %v182 = vsel %vm154, %v98, %v126
    %v183 = vsel %vm155, %v99, %v127
    %v184 = vsel %vm156, %v100, %v128
    %v185 = vsel %vm157, %v101, %v129
    %v186 = vsel %vm158, %v102, %v130
    %v187 = vsel %vm159, %v103, %v131
    %v188 = vsub.f32 %v76, %v160
    %v189 = vsub.f32 %v77, %v161
    %v190 = vsub.f32 %v78, %v162
    %v191 = vsub.f32 %v79, %v163
    %v192 = vsub.f32 %v80, %v164
    %v193 = vsub.f32 %v81, %v165
    %v194 = vsub.f32 %v82, %v166
    %v195 = vsub.f32 %v83, %v167
    %v196 = vsub.f32 %v84, %v168
    %v197 = vsub.f32 %v85, %v169
    %v198 = vsub.f32 %v86, %v170
    %v199 = vsub.f32 %v87, %v171
    %v200 = vsub.f32 %v88, %v172
    %v201 = vsub.f32 %v89, %v173
    %v202 = vsub.f32 %v90, %v174
    %v203 = vsub.f32 %v91, %v175
    %v204 = vsub.f32 %v92, %v176
    %v205 = vsub.f32 %v93, %v177
    %v206 = vsub.f32 %v94, %v178
    %v207 = vsub.f32 %v95, %v179
    %v208 = vsub.f32 %v96, %v180
    %v209 = vsub.f32 %v97, %v181
    %v210 = vsub.f32 %v98, %v182
    %v211 = vsub.f32 %v99, %v183
    %v212 = vsub.f32 %v100, %v184
    %v213 = vsub.f32 %v101, %v185
    %v214 = vsub.f32 %v102, %v186
    %v215 = vsub.f32 %v103, %v187
    %v216 = vld [vmem:[%s2] sm:$0xff]
    %v218 = vlaneseq
    %v219 = vshrl.u32 %v218, 7
    %v220 = vsub.s32 0, %v219
    %v221 = vrot.slane %v216, %v220
    %v222 = vlaneseq
    %v223 = vshrl.u32 %v222, 7
    %v224 = vsub.s32 1, %v223
    %v225 = vrot.slane %v216, %v224
    %v226 = vlaneseq
    %v227 = vshrl.u32 %v226, 7
    %v228 = vsub.s32 2, %v227
    %v229 = vrot.slane %v216, %v228
    %v230 = vlaneseq
    %v231 = vshrl.u32 %v230, 7
    %v232 = vsub.s32 3, %v231
    %v233 = vrot.slane %v216, %v232
    %v234 = vlaneseq
    %v235 = vshrl.u32 %v234, 7
    %v236 = vsub.s32 4, %v235
    %v237 = vrot.slane %v216, %v236
    %v238 = vlaneseq
    %v239 = vshrl.u32 %v238, 7
    %v240 = vsub.s32 5, %v239
    %v241 = vrot.slane %v216, %v240
    %v242 = vlaneseq
    %v243 = vshrl.u32 %v242, 7
    %v244 = vsub.s32 6, %v243
    %v245 = vrot.slane %v216, %v244
    %v253 = vmul.f32 %v188, %v221
    %v254 = vmul.f32 %v189, %v225
    %v255 = vmul.f32 %v190, %v229
    %v256 = vmul.f32 %v191, %v233
    %v257 = vmul.f32 %v192, %v237
    %v258 = vmul.f32 %v193, %v241
    %v259 = vmul.f32 %v194, %v245
    %v260 = vmul.f32 %v195, %v221
    %v261 = vmul.f32 %v196, %v225
    %v262 = vmul.f32 %v197, %v229
    %v263 = vmul.f32 %v198, %v233
    %v264 = vmul.f32 %v199, %v237
    %v265 = vmul.f32 %v200, %v241
    %v266 = vmul.f32 %v201, %v245
    %v267 = vmul.f32 %v202, %v221
    %v268 = vmul.f32 %v203, %v225
    %v269 = vmul.f32 %v204, %v229
    %v270 = vmul.f32 %v205, %v233
    %v271 = vmul.f32 %v206, %v237
    %v272 = vmul.f32 %v207, %v241
    %v273 = vmul.f32 %v208, %v245
    %v274 = vmul.f32 %v209, %v221
    %v275 = vmul.f32 %v210, %v225
    %v276 = vmul.f32 %v211, %v229
    %v277 = vmul.f32 %v212, %v233
    %v278 = vmul.f32 %v213, %v237
    %v279 = vmul.f32 %v214, %v241
    %v280 = vmul.f32 %v215, %v245
    %v281 = vand.u32 2147483647, %v253
    %v282 = vand.u32 2147483647, %v254
    %v283 = vand.u32 2147483647, %v255
    %v284 = vand.u32 2147483647, %v256
    %v285 = vand.u32 2147483647, %v257
    %v286 = vand.u32 2147483647, %v258
    %v287 = vand.u32 2147483647, %v259
    %v288 = vand.u32 2147483647, %v260
    %v289 = vand.u32 2147483647, %v261
    %v290 = vand.u32 2147483647, %v262
    %v291 = vand.u32 2147483647, %v263
    %v292 = vand.u32 2147483647, %v264
    %v293 = vand.u32 2147483647, %v265
    %v294 = vand.u32 2147483647, %v266
    %v295 = vand.u32 2147483647, %v267
    %v296 = vand.u32 2147483647, %v268
    %v297 = vand.u32 2147483647, %v269
    %v298 = vand.u32 2147483647, %v270
    %v299 = vand.u32 2147483647, %v271
    %v300 = vand.u32 2147483647, %v272
    %v301 = vand.u32 2147483647, %v273
    %v302 = vand.u32 2147483647, %v274
    %v303 = vand.u32 2147483647, %v275
    %v304 = vand.u32 2147483647, %v276
    %v305 = vand.u32 2147483647, %v277
    %v306 = vand.u32 2147483647, %v278
    %v307 = vand.u32 2147483647, %v279
    %v308 = vand.u32 2147483647, %v280
    %v309 = vld [vmem:[#allocation7] sm:$0xff]
    %v310 = vld [vmem:[#allocation7 + $0x8] sm:$0xff]
    %v311 = vld [vmem:[#allocation7 + $0x10] sm:$0xff]
    %v312 = vld [vmem:[#allocation7 + $0x18] sm:$0xff]
    %v313 = vld [vmem:[#allocation8] sm:$0xff]
    %v314 = vld [vmem:[#allocation8 + $0x8] sm:$0xff]
    %v315 = vld [vmem:[#allocation8 + $0x10] sm:$0xff]
    %v316 = vld [vmem:[#allocation8 + $0x18] sm:$0xff]
    %v317 = vld [vmem:[#allocation8 + $0x20] sm:$0xff]
    %v318 = vld [vmem:[#allocation8 + $0x28] sm:$0xff]
    %v319 = vld [vmem:[#allocation8 + $0x30] sm:$0xff]
    %v320 = vld [vmem:[#allocation8 + $0x38] sm:$0xff]
    %v321 = vld [vmem:[#allocation8 + $0x40] sm:$0xff]
    %v322 = vld [vmem:[#allocation8 + $0x48] sm:$0xff]
    %v323 = vld [vmem:[#allocation8 + $0x50] sm:$0xff]
    %v324 = vld [vmem:[#allocation8 + $0x58] sm:$0xff]
    %v325 = vld [vmem:[#allocation8 + $0x60] sm:$0xff]
    %v326 = vld [vmem:[#allocation8 + $0x68] sm:$0xff]
    %v327 = vld [vmem:[#allocation8 + $0x70] sm:$0xff]
    %v328 = vld [vmem:[#allocation8 + $0x78] sm:$0xff]
    %v329 = vld [vmem:[#allocation8 + $0x80] sm:$0xff]
    %v330 = vld [vmem:[#allocation8 + $0x88] sm:$0xff]
    %v331 = vld [vmem:[#allocation8 + $0x90] sm:$0xff]
    %v332 = vld [vmem:[#allocation8 + $0x98] sm:$0xff]
    %v333 = vld [vmem:[#allocation8 + $0xa0] sm:$0xff]
    %v334 = vld [vmem:[#allocation8 + $0xa8] sm:$0xff]
    %v335 = vld [vmem:[#allocation8 + $0xb0] sm:$0xff]
    %v336 = vld [vmem:[#allocation8 + $0xb8] sm:$0xff]
    %v337 = vld [vmem:[#allocation8 + $0xc0] sm:$0xff]
    %v338 = vld [vmem:[#allocation8 + $0xc8] sm:$0xff]
    %v339 = vld [vmem:[#allocation8 + $0xd0] sm:$0xff]
    %v340 = vld [vmem:[#allocation8 + $0xd8] sm:$0xff]
    %v341 = vld [vmem:[#allocation8 + $0xe0] sm:$0xff]
    %v342 = vld [vmem:[#allocation8 + $0xe8] sm:$0xff]
    %v343 = vld [vmem:[#allocation8 + $0xf0] sm:$0xff]
    %v344 = vld [vmem:[#allocation8 + $0xf8] sm:$0xff]
    %v345 = vld [vmem:[#allocation8 + $0x100] sm:$0xff]
    %v346 = vld [vmem:[#allocation8 + $0x108] sm:$0xff]
    %v347 = vld [vmem:[#allocation8 + $0x110] sm:$0xff]
    %v348 = vld [vmem:[#allocation8 + $0x118] sm:$0xff]
    %v349 = vld [vmem:[#allocation8 + $0x120] sm:$0xff]
    %v350 = vld [vmem:[#allocation8 + $0x128] sm:$0xff]
    %v351 = vld [vmem:[#allocation8 + $0x130] sm:$0xff]
    %v352 = vld [vmem:[#allocation8 + $0x138] sm:$0xff]
    %v353 = vld [vmem:[#allocation8 + $0x140] sm:$0xff]
    %v354 = vld [vmem:[#allocation8 + $0x148] sm:$0xff]
    %v355 = vld [vmem:[#allocation8 + $0x150] sm:$0xff]
    %v356 = vld [vmem:[#allocation8 + $0x158] sm:$0xff]
    %v357 = vld [vmem:[#allocation8 + $0x160] sm:$0xff]
    %v358 = vld [vmem:[#allocation8 + $0x168] sm:$0xff]
    %v359 = vld [vmem:[#allocation8 + $0x170] sm:$0xff]
    %v360 = vld [vmem:[#allocation8 + $0x178] sm:$0xff]
    %v361 = vld [vmem:[#allocation8 + $0x180] sm:$0xff]
    %v362 = vld [vmem:[#allocation8 + $0x188] sm:$0xff]
    %v363 = vld [vmem:[#allocation8 + $0x190] sm:$0xff]
    %v364 = vld [vmem:[#allocation8 + $0x198] sm:$0xff]
    %v365 = vld [vmem:[#allocation8 + $0x1a0] sm:$0xff]
    %v366 = vld [vmem:[#allocation8 + $0x1a8] sm:$0xff]
    %v367 = vld [vmem:[#allocation8 + $0x1b0] sm:$0xff]
    %v368 = vld [vmem:[#allocation8 + $0x1b8] sm:$0xff]
    %v369 = vld [vmem:[#allocation8 + $0x1c0] sm:$0xff]
    %v370 = vld [vmem:[#allocation8 + $0x1c8] sm:$0xff]
    %v371 = vld [vmem:[#allocation8 + $0x1d0] sm:$0xff]
    %v372 = vld [vmem:[#allocation8 + $0x1d8] sm:$0xff]
    %v373 = vld [vmem:[#allocation8 + $0x1e0] sm:$0xff]
    %v374 = vld [vmem:[#allocation8 + $0x1e8] sm:$0xff]
    %v375 = vld [vmem:[#allocation8 + $0x1f0] sm:$0xff]
    %v376 = vld [vmem:[#allocation8 + $0x1f8] sm:$0xff]
    %v377 = vld [vmem:[#allocation8 + $0x200] sm:$0xff]
    %v378 = vld [vmem:[#allocation8 + $0x208] sm:$0xff]
    %v379 = vld [vmem:[#allocation8 + $0x210] sm:$0xff]
    %v380 = vld [vmem:[#allocation8 + $0x218] sm:$0xff]
    %v381 = vld [vmem:[#allocation8 + $0x220] sm:$0xff]
    %v382 = vld [vmem:[#allocation8 + $0x228] sm:$0xff]
    %v383 = vld [vmem:[#allocation8 + $0x230] sm:$0xff]
    %v384 = vld [vmem:[#allocation8 + $0x238] sm:$0xff]
    %v385 = vld [vmem:[#allocation8 + $0x240] sm:$0xff]
    %v386 = vld [vmem:[#allocation8 + $0x248] sm:$0xff]
    %v387 = vld [vmem:[#allocation8 + $0x250] sm:$0xff]
    %v388 = vld [vmem:[#allocation8 + $0x258] sm:$0xff]
    %v389 = vld [vmem:[#allocation8 + $0x260] sm:$0xff]
    %v390 = vld [vmem:[#allocation8 + $0x268] sm:$0xff]
    %v391 = vld [vmem:[#allocation8 + $0x270] sm:$0xff]
    %v392 = vld [vmem:[#allocation8 + $0x278] sm:$0xff]
    %v393 = vld [vmem:[#allocation8 + $0x280] sm:$0xff]
    %v394 = vld [vmem:[#allocation8 + $0x288] sm:$0xff]
    %v395 = vld [vmem:[#allocation8 + $0x290] sm:$0xff]
    %v396 = vld [vmem:[#allocation8 + $0x298] sm:$0xff]
    %v397 = vld [vmem:[#allocation8 + $0x2a0] sm:$0xff]
    %v398 = vld [vmem:[#allocation8 + $0x2a8] sm:$0xff]
    %v399 = vld [vmem:[#allocation8 + $0x2b0] sm:$0xff]
    %v400 = vld [vmem:[#allocation8 + $0x2b8] sm:$0xff]
    %v401 = vld [vmem:[#allocation8 + $0x2c0] sm:$0xff]
    %v402 = vld [vmem:[#allocation8 + $0x2c8] sm:$0xff]
    %v403 = vld [vmem:[#allocation8 + $0x2d0] sm:$0xff]
    %v404 = vld [vmem:[#allocation8 + $0x2d8] sm:$0xff]
    %v405 = vld [vmem:[#allocation8 + $0x2e0] sm:$0xff]
    %v406 = vld [vmem:[#allocation8 + $0x2e8] sm:$0xff]
    %v407 = vld [vmem:[#allocation8 + $0x2f0] sm:$0xff]
    %v408 = vld [vmem:[#allocation8 + $0x2f8] sm:$0xff]
    %v409 = vld [vmem:[#allocation8 + $0x300] sm:$0xff]
    %v410 = vld [vmem:[#allocation8 + $0x308] sm:$0xff]
    %v411 = vld [vmem:[#allocation8 + $0x310] sm:$0xff]
    %v412 = vld [vmem:[#allocation8 + $0x318] sm:$0xff]
    %v413 = vld [vmem:[#allocation8 + $0x320] sm:$0xff]
    %v414 = vld [vmem:[#allocation8 + $0x328] sm:$0xff]
    %v415 = vld [vmem:[#allocation8 + $0x330] sm:$0xff]
    %v416 = vld [vmem:[#allocation8 + $0x338] sm:$0xff]
    %v417 = vld [vmem:[#allocation8 + $0x340] sm:$0xff]
    %v418 = vld [vmem:[#allocation8 + $0x348] sm:$0xff]
    %v419 = vld [vmem:[#allocation8 + $0x350] sm:$0xff]
    %v420 = vld [vmem:[#allocation8 + $0x358] sm:$0xff]
    %v421 = vld [vmem:[#allocation8 + $0x360] sm:$0xff]
    %v422 = vld [vmem:[#allocation8 + $0x368] sm:$0xff]
    %v423 = vld [vmem:[#allocation8 + $0x370] sm:$0xff]
    %v424 = vld [vmem:[#allocation8 + $0x378] sm:$0xff]
    %v425 = vpack.c.bf16 %v310, %v309
    %v426 = vpack.c.bf16 %v312, %v311
    %v427 = vunpack.c.l.bf16 %v425
    %v428 = vunpack.c.h.bf16 %v425
    %v429 = vunpack.c.l.bf16 %v426
    %v430 = vunpack.c.h.bf16 %v426
    %v431 = vsub.f32 %v309, %v427
    %v432 = vsub.f32 %v310, %v428
    %v433 = vsub.f32 %v311, %v429
    %v434 = vsub.f32 %v312, %v430
    %v435 = vpack.c.bf16 %v432, %v431
    %v436 = vpack.c.bf16 %v434, %v433
    %v437 = vunpack.c.l.bf16 %v435
    %v438 = vunpack.c.h.bf16 %v435
    %v439 = vunpack.c.l.bf16 %v436
    %v440 = vunpack.c.h.bf16 %v436
    %v441 = vsub.f32 %v431, %v437
    %v442 = vsub.f32 %v432, %v438
    %v443 = vsub.f32 %v433, %v439
    %v444 = vsub.f32 %v434, %v440
    %445 = vmatprep.subr.mxu0 %v314
    %446 = vmatpush1.msra.mxu0 %v313
    %447 = vmatprep.subr.mxu0 %v321
    %448 = vmatpush1.msra.mxu0 %v320
    %449 = vmatprep.subr.mxu0 %v328
    %450 = vmatpush1.msra.mxu0 %v327
    %451 = vmatprep.subr.mxu0 %v335
    %452 = vmatpush1.msra.mxu0 %v334
    %453 = vmatprep.subr.mxu0 %v342
    %454 = vmatpush1.msra.mxu0 %v341
    %455 = vmatprep.subr.mxu0 %v349
    %456 = vmatpush1.msra.mxu0 %v348
    %457 = vmatprep.subr.mxu0 %v356
    %458 = vmatpush1.msra.mxu0 %v355
    %459 = vmatprep.subr.mxu0 %v363
    %460 = vmatpush1.msra.mxu0 %v362
    %461 = vmatprep.subr.mxu0 %v370
    %462 = vmatpush1.msra.mxu0 %v369
    %463 = vmatprep.subr.mxu0 %v377
    %464 = vmatpush1.msra.mxu0 %v376
    %465 = vmatprep.subr.mxu0 %v384
    %466 = vmatpush1.msra.mxu0 %v383
    %467 = vmatprep.subr.mxu0 %v391
    %468 = vmatpush1.msra.mxu0 %v390
    %469 = vmatprep.subr.mxu0 %v398
    %470 = vmatpush1.msra.mxu0 %v397
    %471 = vmatprep.subr.mxu0 %v405
    %472 = vmatpush1.msra.mxu0 %v404
    %473 = vmatprep.subr.mxu0 %v412
    %474 = vmatpush1.msra.mxu0 %v411
    %475 = vmatprep.subr.mxu0 %v419
    %476 = vmatpush1.msra.mxu0 %v418
    %477 = vmatprep.subr.mxu0 0.0
    %478 = vmatpush1.msra.mxu0 0.0
    %479 = vmatprep.subr.mxu0 0.0
    %480 = vmatpush1.msra.mxu0 0.0
    %481 = vmatprep.subr.mxu0 0.0
    %482 = vmatpush1.msra.mxu0 0.0
    %483 = vmatprep.subr.mxu0 0.0
    %484 = vmatpush1.msra.mxu0 0.0
    %485 = vmatprep.subr.mxu0 0.0
    %486 = vmatpush1.msra.mxu0 0.0
    %487 = vmatprep.subr.mxu0 0.0
    %488 = vmatpush1.msra.mxu0 0.0
    %489 = vmatprep.subr.mxu0 0.0
    %490 = vmatpush1.msra.mxu0 0.0
    %491 = vmatprep.subr.mxu0 0.0
    %492 = vmatpush1.msra.mxu0 0.0
    %493 = vmatprep.subr.mxu0 0.0
    %494 = vmatpush1.msra.mxu0 0.0
    %495 = vmatprep.subr.mxu0 0.0
    %496 = vmatpush1.msra.mxu0 0.0
    %497 = vmatprep.subr.mxu0 0.0
    %498 = vmatpush1.msra.mxu0 0.0
    %499 = vmatprep.subr.mxu0 0.0
    %500 = vmatpush1.msra.mxu0 0.0
    %501 = vmatprep.subr.mxu0 0.0
    %502 = vmatpush1.msra.mxu0 0.0
    %503 = vmatprep.subr.mxu0 0.0
    %504 = vmatpush1.msra.mxu0 0.0
    %505 = vmatprep.subr.mxu0 0.0
    %506 = vmatpush1.msra.mxu0 0.0
    %507 = vmatprep.subr.mxu0 0.0
    %508 = vmatpush1.msra.mxu0 0.0
    %509 = vmatprep.mubr.f32.mxu0 0.0
    %510 = vmatmul.mubr.f32.gmra.mrb[0].mxu0 %v437
    %v511 = vpop.f32.mrb[0].mxu0
    %v512 = vadd.f32 0.0, %v511
    %v513 = vpop.f32.mrb[0].mxu0
    %v514 = vadd.f32 0.0, %v513
    %515 = vmatprep.mubr.f32.mxu0 0.0
    %516 = vmatmul.mubr.f32.gmra.mrb[0].mxu0 %v438
    %v517 = vpop.f32.mrb[0].mxu0
    %v518 = vadd.f32 0.0, %v517
    %v519 = vpop.f32.mrb[0].mxu0
    %v520 = vadd.f32 0.0, %v519
    %521 = vmatprep.mubr.f32.mxu0 0.0
    %522 = vmatmul.mubr.f32.gmra.mrb[0].mxu0 %v439
    %v523 = vpop.f32.mrb[0].mxu0
    %v524 = vadd.f32 0.0, %v523
    %v525 = vpop.f32.mrb[0].mxu0
    %v526 = vadd.f32 0.0, %v525
    %527 = vmatprep.mubr.f32.mxu0 0.0
    %528 = vmatmul.mubr.f32.gmra.mrb[0].mxu0 %v440
    %v529 = vpop.f32.mrb[0].mxu0
    %v530 = vadd.f32 0.0, %v529
    %v531 = vpop.f32.mrb[0].mxu0
    %v532 = vadd.f32 0.0, %v531
    %533 = vdwg.mxu0
    %534 = vmatprep.subr.mxu0 %v316
    %535 = vmatpush1.msra.mxu0 %v315
    %536 = vmatprep.subr.mxu0 %v323
    %537 = vmatpush1.msra.mxu0 %v322
    %538 = vmatprep.subr.mxu0 %v330
    %539 = vmatpush1.msra.mxu0 %v329
    %540 = vmatprep.subr.mxu0 %v337
    %541 = vmatpush1.msra.mxu0 %v336
    %542 = vmatprep.subr.mxu0 %v344
    %543 = vmatpush1.msra.mxu0 %v343
    %544 = vmatprep.subr.mxu0 %v351
    %545 = vmatpush1.msra.mxu0 %v350
    %546 = vmatprep.subr.mxu0 %v358
    %547 = vmatpush1.msra.mxu0 %v357
    %548 = vmatprep.subr.mxu0 %v365
    %549 = vmatpush1.msra.mxu0 %v364
    %550 = vmatprep.subr.mxu0 %v372
    %551 = vmatpush1.msra.mxu0 %v371
    %552 = vmatprep.subr.mxu0 %v379
    %553 = vmatpush1.msra.mxu0 %v378
    %554 = vmatprep.subr.mxu0 %v386
    %555 = vmatpush1.msra.mxu0 %v385
    %556 = vmatprep.subr.mxu0 %v393
    %557 = vmatpush1.msra.mxu0 %v392
    %558 = vmatprep.subr.mxu0 %v400
    %559 = vmatpush1.msra.mxu0 %v399
    %560 = vmatprep.subr.mxu0 %v407
    %561 = vmatpush1.msra.mxu0 %v406
    %562 = vmatprep.subr.mxu0 %v414
    %563 = vmatpush1.msra.mxu0 %v413
    %564 = vmatprep.subr.mxu0 %v421
    %565 = vmatpush1.msra.mxu0 %v420
    %566 = vmatprep.subr.mxu0 0.0
    %567 = vmatpush1.msra.mxu0 0.0
    %568 = vmatprep.subr.mxu0 0.0
    %569 = vmatpush1.msra.mxu0 0.0
    %570 = vmatprep.subr.mxu0 0.0
    %571 = vmatpush1.msra.mxu0 0.0
    %572 = vmatprep.subr.mxu0 0.0
    %573 = vmatpush1.msra.mxu0 0.0
    %574 = vmatprep.subr.mxu0 0.0
    %575 = vmatpush1.msra.mxu0 0.0
    %576 = vmatprep.subr.mxu0 0.0
    %577 = vmatpush1.msra.mxu0 0.0
    %578 = vmatprep.subr.mxu0 0.0
    %579 = vmatpush1.msra.mxu0 0.0
    %580 = vmatprep.subr.mxu0 0.0
    %581 = vmatpush1.msra.mxu0 0.0
    %582 = vmatprep.subr.mxu0 0.0
    %583 = vmatpush1.msra.mxu0 0.0
    %584 = vmatprep.subr.mxu0 0.0
    %585 = vmatpush1.msra.mxu0 0.0
    %586 = vmatprep.subr.mxu0 0.0
    %587 = vmatpush1.msra.mxu0 0.0
    %588 = vmatprep.subr.mxu0 0.0
    %589 = vmatpush1.msra.mxu0 0.0
    %590 = vmatprep.subr.mxu0 0.0
    %591 = vmatpush1.msra.mxu0 0.0
    %592 = vmatprep.subr.mxu0 0.0
    %593 = vmatpush1.msra.mxu0 0.0
    %594 = vmatprep.subr.mxu0 0.0
    %595 = vmatpush1.msra.mxu0 0.0
    %596 = vmatprep.subr.mxu0 0.0
    %597 = vmatpush1.msra.mxu0 0.0
    %598 = vmatprep.mubr.f32.mxu0 0.0
    %599 = vmatmul.mubr.f32.gmra.mrb[0].mxu0 %v437
    %v600 = vpop.f32.mrb[0].mxu0
    %v601 = vadd.f32 0.0, %v600
    %v602 = vpop.f32.mrb[0].mxu0
    %v603 = vadd.f32 0.0, %v602
    %604 = vmatprep.mubr.f32.mxu0 0.0
    %605 = vmatmul.mubr.f32.gmra.mrb[0].mxu0 %v438
    %v606 = vpop.f32.mrb[0].mxu0
    %v607 = vadd.f32 0.0, %v606
    %v608 = vpop.f32.mrb[0].mxu0
    %v609 = vadd.f32 0.0, %v608
    %610 = vmatprep.mubr.f32.mxu0 0.0
    %611 = vmatmul.mubr.f32.gmra.mrb[0].mxu0 %v439
    %v612 = vpop.f32.mrb[0].mxu0
    %v613 = vadd.f32 0.0, %v612
    %v614 = vpop.f32.mrb[0].mxu0
    %v615 = vadd.f32 0.0, %v614
    %616 = vmatprep.mubr.f32.mxu0 0.0
    %617 = vmatmul.mubr.f32.gmra.mrb[0].mxu0 %v440
    %v618 = vpop.f32.mrb[0].mxu0
    %v619 = vadd.f32 0.0, %v618
    %v620 = vpop.f32.mrb[0].mxu0
    %v621 = vadd.f32 0.0, %v620
    %622 = vdwg.mxu0
    %623 = vmatprep.subr.mxu0 %v318
    %624 = vmatpush1.msra.mxu0 %v317
    %625 = vmatprep.subr.mxu0 %v325
    %626 = vmatpush1.msra.mxu0 %v324
    %627 = vmatprep.subr.mxu0 %v332
    %628 = vmatpush1.msra.mxu0 %v331
    %629 = vmatprep.subr.mxu0 %v339
    %630 = vmatpush1.msra.mxu0 %v338
    %631 = vmatprep.subr.mxu0 %v346
    %632 = vmatpush1.msra.mxu0 %v345
    %633 = vmatprep.subr.mxu0 %v353
    %634 = vmatpush1.msra.mxu0 %v352
    %635 = vmatprep.subr.mxu0 %v360
    %636 = vmatpush1.msra.mxu0 %v359
    %637 = vmatprep.subr.mxu0 %v367
    %638 = vmatpush1.msra.mxu0 %v366
    %639 = vmatprep.subr.mxu0 %v374
    %640 = vmatpush1.msra.mxu0 %v373
    %641 = vmatprep.subr.mxu0 %v381
    %642 = vmatpush1.msra.mxu0 %v380
    %643 = vmatprep.subr.mxu0 %v388
    %644 = vmatpush1.msra.mxu0 %v387
    %645 = vmatprep.subr.mxu0 %v395
    %646 = vmatpush1.msra.mxu0 %v394
    %647 = vmatprep.subr.mxu0 %v402
    %648 = vmatpush1.msra.mxu0 %v401
    %649 = vmatprep.subr.mxu0 %v409
    %650 = vmatpush1.msra.mxu0 %v408
    %651 = vmatprep.subr.mxu0 %v416
    %652 = vmatpush1.msra.mxu0 %v415
    %653 = vmatprep.subr.mxu0 %v423
    %654 = vmatpush1.msra.mxu0 %v422
    %655 = vmatprep.subr.mxu0 0.0
    %656 = vmatpush1.msra.mxu0 0.0
    %657 = vmatprep.subr.mxu0 0.0
    %658 = vmatpush1.msra.mxu0 0.0
    %659 = vmatprep.subr.mxu0 0.0
    %660 = vmatpush1.msra.mxu0 0.0
    %661 = vmatprep.subr.mxu0 0.0
    %662 = vmatpush1.msra.mxu0 0.0
    %663 = vmatprep.subr.mxu0 0.0
    %664 = vmatpush1.msra.mxu0 0.0
    %665 = vmatprep.subr.mxu0 0.0
    %666 = vmatpush1.msra.mxu0 0.0
    %667 = vmatprep.subr.mxu0 0.0
    %668 = vmatpush1.msra.mxu0 0.0
    %669 = vmatprep.subr.mxu0 0.0
    %670 = vmatpush1.msra.mxu0 0.0
    %671 = vmatprep.subr.mxu0 0.0
    %672 = vmatpush1.msra.mxu0 0.0
    %673 = vmatprep.subr.mxu0 0.0
    %674 = vmatpush1.msra.mxu0 0.0
    %675 = vmatprep.subr.mxu0 0.0
    %676 = vmatpush1.msra.mxu0 0.0
    %677 = vmatprep.subr.mxu0 0.0
    %678 = vmatpush1.msra.mxu0 0.0
    %679 = vmatprep.subr.mxu0 0.0
    %680 = vmatpush1.msra.mxu0 0.0
    %681 = vmatprep.subr.mxu0 0.0
    %682 = vmatpush1.msra.mxu0 0.0
    %683 = vmatprep.subr.mxu0 0.0
    %684 = vmatpush1.msra.mxu0 0.0
    %685 = vmatprep.subr.mxu0 0.0
    %686 = vmatpush1.msra.mxu0 0.0
    %687 = vmatprep.mubr.f32.mxu0 0.0
    %688 = vmatmul.mubr.f32.gmra.mrb[0].mxu0 %v437
    %v689 = vpop.f32.mrb[0].mxu0
    %v690 = vadd.f32 0.0, %v689
    %v691 = vpop.f32.mrb[0].mxu0
    %v692 = vadd.f32 0.0, %v691
    %693 = vmatprep.mubr.f32.mxu0 0.0
    %694 = vmatmul.mubr.f32.gmra.mrb[0].mxu0 %v438
    %v695 = vpop.f32.mrb[0].mxu0
    %v696 = vadd.f32 0.0, %v695
    %v697 = vpop.f32.mrb[0].mxu0
    %v698 = vadd.f32 0.0, %v697
    %699 = vmatprep.mubr.f32.mxu0 0.0
    %700 = vmatmul.mubr.f32.gmra.mrb[0].mxu0 %v439
    %v701 = vpop.f32.mrb[0].mxu0
    %v702 = vadd.f32 0.0, %v701
    %v703 = vpop.f32.mrb[0].mxu0
    %v704 = vadd.f32 0.0, %v703
    %705 = vmatprep.mubr.f32.mxu0 0.0
    %706 = vmatmul.mubr.f32.gmra.mrb[0].mxu0 %v440
    %v707 = vpop.f32.mrb[0].mxu0
    %v708 = vadd.f32 0.0, %v707
    %v709 = vpop.f32.mrb[0].mxu0
    %v710 = vadd.f32 0.0, %v709
    %711 = vdwg.mxu0
    %712 = vmatprep.subr.mxu0 0.0
    %713 = vmatpush1.msra.mxu0 %v319
    %714 = vmatprep.subr.mxu0 0.0
    %715 = vmatpush1.msra.mxu0 %v326
    %716 = vmatprep.subr.mxu0 0.0
    %717 = vmatpush1.msra.mxu0 %v333
    %718 = vmatprep.subr.mxu0 0.0
    %719 = vmatpush1.msra.mxu0 %v340
    %720 = vmatprep.subr.mxu0 0.0
    %721 = vmatpush1.msra.mxu0 %v347
    %722 = vmatprep.subr.mxu0 0.0
    %723 = vmatpush1.msra.mxu0 %v354
    %724 = vmatprep.subr.mxu0 0.0
    %725 = vmatpush1.msra.mxu0 %v361
    %726 = vmatprep.subr.mxu0 0.0
    %727 = vmatpush1.msra.mxu0 %v368
    %728 = vmatprep.subr.mxu0 0.0
    %729 = vmatpush1.msra.mxu0 %v375
    %730 = vmatprep.subr.mxu0 0.0
    %731 = vmatpush1.msra.mxu0 %v382
    %732 = vmatprep.subr.mxu0 0.0
    %733 = vmatpush1.msra.mxu0 %v389
    %734 = vmatprep.subr.mxu0 0.0
    %735 = vmatpush1.msra.mxu0 %v396
    %736 = vmatprep.subr.mxu0 0.0
    %737 = vmatpush1.msra.mxu0 %v403
    %738 = vmatprep.subr.mxu0 0.0
    %739 = vmatpush1.msra.mxu0 %v410
    %740 = vmatprep.subr.mxu0 0.0
    %741 = vmatpush1.msra.mxu0 %v417
    %742 = vmatprep.subr.mxu0 0.0
    %743 = vmatpush1.msra.mxu0 %v424
    %744 = vmatprep.subr.mxu0 0.0
    %745 = vmatpush1.msra.mxu0 0.0
    %746 = vmatprep.subr.mxu0 0.0
    %747 = vmatpush1.msra.mxu0 0.0
    %748 = vmatprep.subr.mxu0 0.0
    %749 = vmatpush1.msra.mxu0 0.0
    %750 = vmatprep.subr.mxu0 0.0
    %751 = vmatpush1.msra.mxu0 0.0
    %752 = vmatprep.subr.mxu0 0.0
    %753 = vmatpush1.msra.mxu0 0.0
    %754 = vmatprep.subr.mxu0 0.0
    %755 = vmatpush1.msra.mxu0 0.0
    %756 = vmatprep.subr.mxu0 0.0
    %757 = vmatpush1.msra.mxu0 0.0
    %758 = vmatprep.subr.mxu0 0.0
    %759 = vmatpush1.msra.mxu0 0.0
    %760 = vmatprep.subr.mxu0 0.0
    %761 = vmatpush1.msra.mxu0 0.0
    %762 = vmatprep.subr.mxu0 0.0
    %763 = vmatpush1.msra.mxu0 0.0
    %764 = vmatprep.subr.mxu0 0.0
    %765 = vmatpush1.msra.mxu0 0.0
    %766 = vmatprep.subr.mxu0 0.0
    %767 = vmatpush1.msra.mxu0 0.0
    %768 = vmatprep.subr.mxu0 0.0
    %769 = vmatpush1.msra.mxu0 0.0
    %770 = vmatprep.subr.mxu0 0.0
    %771 = vmatpush1.msra.mxu0 0.0
    %772 = vmatprep.subr.mxu0 0.0
    %773 = vmatpush1.msra.mxu0 0.0
    %774 = vmatprep.subr.mxu0 0.0
    %775 = vmatpush1.msra.mxu0 0.0
    %776 = vmatprep.mubr.f32.mxu0 0.0
    %777 = vmatmul.mubr.f32.gmra.mrb[0].mxu0 %v437
    %v778 = vpop.f32.mrb[0].mxu0
    %v779 = vadd.f32 0.0, %v778
    %v780 = vpop.f32.mrb[0].mxu0
    %781 = vmatprep.mubr.f32.mxu0 0.0
    %782 = vmatmul.mubr.f32.gmra.mrb[0].mxu0 %v438
    %v783 = vpop.f32.mrb[0].mxu0
    %v784 = vadd.f32 0.0, %v783
    %v785 = vpop.f32.mrb[0].mxu0
    %786 = vmatprep.mubr.f32.mxu0 0.0
    %787 = vmatmul.mubr.f32.gmra.mrb[0].mxu0 %v439
    %v788 = vpop.f32.mrb[0].mxu0
    %v789 = vadd.f32 0.0, %v788
    %v790 = vpop.f32.mrb[0].mxu0
    %791 = vmatprep.mubr.f32.mxu0 0.0
    %792 = vmatmul.mubr.f32.gmra.mrb[0].mxu0 %v440
    %v793 = vpop.f32.mrb[0].mxu0
    %v794 = vadd.f32 0.0, %v793
    %v795 = vpop.f32.mrb[0].mxu0
    %796 = vdwg.mxu0
    %797 = vmatprep.subr.mxu0 %v314
    %798 = vmatpush1.msra.mxu0 %v313
    %799 = vmatprep.subr.mxu0 %v321
    %800 = vmatpush1.msra.mxu0 %v320
    %801 = vmatprep.subr.mxu0 %v328
    %802 = vmatpush1.msra.mxu0 %v327
    %803 = vmatprep.subr.mxu0 %v335
    %804 = vmatpush1.msra.mxu0 %v334
    %805 = vmatprep.subr.mxu0 %v342
    %806 = vmatpush1.msra.mxu0 %v341
    %807 = vmatprep.subr.mxu0 %v349
    %808 = vmatpush1.msra.mxu0 %v348
    %809 = vmatprep.subr.mxu0 %v356
    %810 = vmatpush1.msra.mxu0 %v355
    %811 = vmatprep.subr.mxu0 %v363
    %812 = vmatpush1.msra.mxu0 %v362
    %813 = vmatprep.subr.mxu0 %v370
    %814 = vmatpush1.msra.mxu0 %v369
    %815 = vmatprep.subr.mxu0 %v377
    %816 = vmatpush1.msra.mxu0 %v376
    %817 = vmatprep.subr.mxu0 %v384
    %818 = vmatpush1.msra.mxu0 %v383
    %819 = vmatprep.subr.mxu0 %v391
    %820 = vmatpush1.msra.mxu0 %v390
    %821 = vmatprep.subr.mxu0 %v398
    %822 = vmatpush1.msra.mxu0 %v397
    %823 = vmatprep.subr.mxu0 %v405
    %824 = vmatpush1.msra.mxu0 %v404
    %825 = vmatprep.subr.mxu0 %v412
    %826 = vmatpush1.msra.mxu0 %v411
    %827 = vmatprep.subr.mxu0 %v419
    %828 = vmatpush1.msra.mxu0 %v418
    %829 = vmatprep.subr.mxu0 0.0
    %830 = vmatpush1.msra.mxu0 0.0
    %831 = vmatprep.subr.mxu0 0.0
    %832 = vmatpush1.msra.mxu0 0.0
    %833 = vmatprep.subr.mxu0 0.0
    %834 = vmatpush1.msra.mxu0 0.0
    %835 = vmatprep.subr.mxu0 0.0
    %836 = vmatpush1.msra.mxu0 0.0
    %837 = vmatprep.subr.mxu0 0.0
    %838 = vmatpush1.msra.mxu0 0.0
    %839 = vmatprep.subr.mxu0 0.0
    %840 = vmatpush1.msra.mxu0 0.0
    %841 = vmatprep.subr.mxu0 0.0
    %842 = vmatpush1.msra.mxu0 0.0
    %843 = vmatprep.subr.mxu0 0.0
    %844 = vmatpush1.msra.mxu0 0.0
    %845 = vmatprep.subr.mxu0 0.0
    %846 = vmatpush1.msra.mxu0 0.0
    %847 = vmatprep.subr.mxu0 0.0
    %848 = vmatpush1.msra.mxu0 0.0
    %849 = vmatprep.subr.mxu0 0.0
    %850 = vmatpush1.msra.mxu0 0.0
    %851 = vmatprep.subr.mxu0 0.0
    %852 = vmatpush1.msra.mxu0 0.0
    %853 = vmatprep.subr.mxu0 0.0
    %854 = vmatpush1.msra.mxu0 0.0
    %855 = vmatprep.subr.mxu0 0.0
    %856 = vmatpush1.msra.mxu0 0.0
    %857 = vmatprep.subr.mxu0 0.0
    %858 = vmatpush1.msra.mxu0 0.0
    %859 = vmatprep.subr.mxu0 0.0
    %860 = vmatpush1.msra.mxu0 0.0
    %861 = vmatprep.mubr.f32.mxu0 0.0
    %862 = vmatmul.mubr.f32.gmra.mrb[0].mxu0 %v427
    %v863 = vpop.f32.mrb[0].mxu0
    %v864 = vadd.f32 %v512, %v863
    %v865 = vpop.f32.mrb[0].mxu0
    %v866 = vadd.f32 %v514, %v865
    %867 = vmatprep.mubr.f32.mxu0 0.0
    %868 = vmatmul.mubr.f32.gmra.mrb[0].mxu0 %v428
    %v869 = vpop.f32.mrb[0].mxu0
    %v870 = vadd.f32 %v518, %v869
    %v871 = vpop.f32.mrb[0].mxu0
    %v872 = vadd.f32 %v520, %v871
    %873 = vmatprep.mubr.f32.mxu0 0.0
    %874 = vmatmul.mubr.f32.gmra.mrb[0].mxu0 %v429
    %v875 = vpop.f32.mrb[0].mxu0
    %v876 = vadd.f32 %v524, %v875
    %v877 = vpop.f32.mrb[0].mxu0
    %v878 = vadd.f32 %v526, %v877
    %879 = vmatprep.mubr.f32.mxu0 0.0
    %880 = vmatmul.mubr.f32.gmra.mrb[0].mxu0 %v430
    %v881 = vpop.f32.mrb[0].mxu0
    %v882 = vadd.f32 %v530, %v881
    %v883 = vpop.f32.mrb[0].mxu0
    %v884 = vadd.f32 %v532, %v883
    %885 = vdwg.mxu0
    %886 = vmatprep.subr.mxu0 %v316
    %887 = vmatpush1.msra.mxu0 %v315
    %888 = vmatprep.subr.mxu0 %v323
    %889 = vmatpush1.msra.mxu0 %v322
    %890 = vmatprep.subr.mxu0 %v330
    %891 = vmatpush1.msra.mxu0 %v329
    %892 = vmatprep.subr.mxu0 %v337
    %893 = vmatpush1.msra.mxu0 %v336
    %894 = vmatprep.subr.mxu0 %v344
    %895 = vmatpush1.msra.mxu0 %v343
    %896 = vmatprep.subr.mxu0 %v351
    %897 = vmatpush1.msra.mxu0 %v350
    %898 = vmatprep.subr.mxu0 %v358
    %899 = vmatpush1.msra.mxu0 %v357
    %900 = vmatprep.subr.mxu0 %v365
    %901 = vmatpush1.msra.mxu0 %v364
    %902 = vmatprep.subr.mxu0 %v372
    %903 = vmatpush1.msra.mxu0 %v371
    %904 = vmatprep.subr.mxu0 %v379
    %905 = vmatpush1.msra.mxu0 %v378
    %906 = vmatprep.subr.mxu0 %v386
    %907 = vmatpush1.msra.mxu0 %v385
    %908 = vmatprep.subr.mxu0 %v393
    %909 = vmatpush1.msra.mxu0 %v392
    %910 = vmatprep.subr.mxu0 %v400
    %911 = vmatpush1.msra.mxu0 %v399
    %912 = vmatprep.subr.mxu0 %v407
    %913 = vmatpush1.msra.mxu0 %v406
    %914 = vmatprep.subr.mxu0 %v414
    %915 = vmatpush1.msra.mxu0 %v413
    %916 = vmatprep.subr.mxu0 %v421
    %917 = vmatpush1.msra.mxu0 %v420
    %918 = vmatprep.subr.mxu0 0.0
    %919 = vmatpush1.msra.mxu0 0.0
    %920 = vmatprep.subr.mxu0 0.0
    %921 = vmatpush1.msra.mxu0 0.0
    %922 = vmatprep.subr.mxu0 0.0
    %923 = vmatpush1.msra.mxu0 0.0
    %924 = vmatprep.subr.mxu0 0.0
    %925 = vmatpush1.msra.mxu0 0.0
    %926 = vmatprep.subr.mxu0 0.0
    %927 = vmatpush1.msra.mxu0 0.0
    %928 = vmatprep.subr.mxu0 0.0
    %929 = vmatpush1.msra.mxu0 0.0
    %930 = vmatprep.subr.mxu0 0.0
    %931 = vmatpush1.msra.mxu0 0.0
    %932 = vmatprep.subr.mxu0 0.0
    %933 = vmatpush1.msra.mxu0 0.0
    %934 = vmatprep.subr.mxu0 0.0
    %935 = vmatpush1.msra.mxu0 0.0
    %936 = vmatprep.subr.mxu0 0.0
    %937 = vmatpush1.msra.mxu0 0.0
    %938 = vmatprep.subr.mxu0 0.0
    %939 = vmatpush1.msra.mxu0 0.0
    %940 = vmatprep.subr.mxu0 0.0
    %941 = vmatpush1.msra.mxu0 0.0
    %942 = vmatprep.subr.mxu0 0.0
    %943 = vmatpush1.msra.mxu0 0.0
    %944 = vmatprep.subr.mxu0 0.0
    %945 = vmatpush1.msra.mxu0 0.0
    %946 = vmatprep.subr.mxu0 0.0
    %947 = vmatpush1.msra.mxu0 0.0
    %948 = vmatprep.subr.mxu0 0.0
    %949 = vmatpush1.msra.mxu0 0.0
    %950 = vmatprep.mubr.f32.mxu0 0.0
    %951 = vmatmul.mubr.f32.gmra.mrb[0].mxu0 %v427
    %v952 = vpop.f32.mrb[0].mxu0
    %v953 = vadd.f32 %v601, %v952
    %v954 = vpop.f32.mrb[0].mxu0
    %v955 = vadd.f32 %v603, %v954
    %956 = vmatprep.mubr.f32.mxu0 0.0
    %957 = vmatmul.mubr.f32.gmra.mrb[0].mxu0 %v428
    %v958 = vpop.f32.mrb[0].mxu0
    %v959 = vadd.f32 %v607, %v958
    %v960 = vpop.f32.mrb[0].mxu0
    %v961 = vadd.f32 %v609, %v960
    %962 = vmatprep.mubr.f32.mxu0 0.0
    %963 = vmatmul.mubr.f32.gmra.mrb[0].mxu0 %v429
    %v964 = vpop.f32.mrb[0].mxu0
    %v965 = vadd.f32 %v613, %v964
    %v966 = vpop.f32.mrb[0].mxu0
    %v967 = vadd.f32 %v615, %v966
    %968 = vmatprep.mubr.f32.mxu0 0.0
    %969 = vmatmul.mubr.f32.gmra.mrb[0].mxu0 %v430
    %v970 = vpop.f32.mrb[0].mxu0
    %v971 = vadd.f32 %v619, %v970
    %v972 = vpop.f32.mrb[0].mxu0
    %v973 = vadd.f32 %v621, %v972
    %974 = vdwg.mxu0
    %975 = vmatprep.subr.mxu0 %v318
    %976 = vmatpush1.msra.mxu0 %v317
    %977 = vmatprep.subr.mxu0 %v325
    %978 = vmatpush1.msra.mxu0 %v324
    %979 = vmatprep.subr.mxu0 %v332
    %980 = vmatpush1.msra.mxu0 %v331
    %981 = vmatprep.subr.mxu0 %v339
    %982 = vmatpush1.msra.mxu0 %v338
    %983 = vmatprep.subr.mxu0 %v346
    %984 = vmatpush1.msra.mxu0 %v345
    %985 = vmatprep.subr.mxu0 %v353
    %986 = vmatpush1.msra.mxu0 %v352
    %987 = vmatprep.subr.mxu0 %v360
    %988 = vmatpush1.msra.mxu0 %v359
    %989 = vmatprep.subr.mxu0 %v367
    %990 = vmatpush1.msra.mxu0 %v366
    %991 = vmatprep.subr.mxu0 %v374
    %992 = vmatpush1.msra.mxu0 %v373
    %993 = vmatprep.subr.mxu0 %v381
    %994 = vmatpush1.msra.mxu0 %v380
    %995 = vmatprep.subr.mxu0 %v388
    %996 = vmatpush1.msra.mxu0 %v387
    %997 = vmatprep.subr.mxu0 %v395
    %998 = vmatpush1.msra.mxu0 %v394
    %999 = vmatprep.subr.mxu0 %v402
    %1000 = vmatpush1.msra.mxu0 %v401
    %1001 = vmatprep.subr.mxu0 %v409
    %1002 = vmatpush1.msra.mxu0 %v408
    %1003 = vmatprep.subr.mxu0 %v416
    %1004 = vmatpush1.msra.mxu0 %v415
    %1005 = vmatprep.subr.mxu0 %v423
    %1006 = vmatpush1.msra.mxu0 %v422
    %1007 = vmatprep.subr.mxu0 0.0
    %1008 = vmatpush1.msra.mxu0 0.0
    %1009 = vmatprep.subr.mxu0 0.0
    %1010 = vmatpush1.msra.mxu0 0.0
    %1011 = vmatprep.subr.mxu0 0.0
    %1012 = vmatpush1.msra.mxu0 0.0
    %1013 = vmatprep.subr.mxu0 0.0
    %1014 = vmatpush1.msra.mxu0 0.0
    %1015 = vmatprep.subr.mxu0 0.0
    %1016 = vmatpush1.msra.mxu0 0.0
    %1017 = vmatprep.subr.mxu0 0.0
    %1018 = vmatpush1.msra.mxu0 0.0
    %1019 = vmatprep.subr.mxu0 0.0
    %1020 = vmatpush1.msra.mxu0 0.0
    %1021 = vmatprep.subr.mxu0 0.0
    %1022 = vmatpush1.msra.mxu0 0.0
    %1023 = vmatprep.subr.mxu0 0.0
    %1024 = vmatpush1.msra.mxu0 0.0
    %1025 = vmatprep.subr.mxu0 0.0
    %1026 = vmatpush1.msra.mxu0 0.0
    %1027 = vmatprep.subr.mxu0 0.0
    %1028 = vmatpush1.msra.mxu0 0.0
    %1029 = vmatprep.subr.mxu0 0.0
    %1030 = vmatpush1.msra.mxu0 0.0
    %1031 = vmatprep.subr.mxu0 0.0
    %1032 = vmatpush1.msra.mxu0 0.0
    %1033 = vmatprep.subr.mxu0 0.0
    %1034 = vmatpush1.msra.mxu0 0.0
    %1035 = vmatprep.subr.mxu0 0.0
    %1036 = vmatpush1.msra.mxu0 0.0
    %1037 = vmatprep.subr.mxu0 0.0
    %1038 = vmatpush1.msra.mxu0 0.0
    %1039 = vmatprep.mubr.f32.mxu0 0.0
    %1040 = vmatmul.mubr.f32.gmra.mrb[0].mxu0 %v427
    %v1041 = vpop.f32.mrb[0].mxu0
    %v1042 = vadd.f32 %v690, %v1041
    %v1043 = vpop.f32.mrb[0].mxu0
    %v1044 = vadd.f32 %v692, %v1043
    %1045 = vmatprep.mubr.f32.mxu0 0.0
    %1046 = vmatmul.mubr.f32.gmra.mrb[0].mxu0 %v428
    %v1047 = vpop.f32.mrb[0].mxu0
    %v1048 = vadd.f32 %v696, %v1047
    %v1049 = vpop.f32.mrb[0].mxu0
    %v1050 = vadd.f32 %v698, %v1049
    %1051 = vmatprep.mubr.f32.mxu0 0.0
    %1052 = vmatmul.mubr.f32.gmra.mrb[0].mxu0 %v429
    %v1053 = vpop.f32.mrb[0].mxu0
    %v1054 = vadd.f32 %v702, %v1053
    %v1055 = vpop.f32.mrb[0].mxu0
    %v1056 = vadd.f32 %v704, %v1055
    %1057 = vmatprep.mubr.f32.mxu0 0.0
    %1058 = vmatmul.mubr.f32.gmra.mrb[0].mxu0 %v430
    %v1059 = vpop.f32.mrb[0].mxu0
    %v1060 = vadd.f32 %v708, %v1059
    %v1061 = vpop.f32.mrb[0].mxu0
    %v1062 = vadd.f32 %v710, %v1061
    %1063 = vdwg.mxu0
    %1064 = vmatprep.subr.mxu0 0.0
    %1065 = vmatpush1.msra.mxu0 %v319
    %1066 = vmatprep.subr.mxu0 0.0
    %1067 = vmatpush1.msra.mxu0 %v326
    %1068 = vmatprep.subr.mxu0 0.0
    %1069 = vmatpush1.msra.mxu0 %v333
    %1070 = vmatprep.subr.mxu0 0.0
    %1071 = vmatpush1.msra.mxu0 %v340
    %1072 = vmatprep.subr.mxu0 0.0
    %1073 = vmatpush1.msra.mxu0 %v347
    %1074 = vmatprep.subr.mxu0 0.0
    %1075 = vmatpush1.msra.mxu0 %v354
    %1076 = vmatprep.subr.mxu0 0.0
    %1077 = vmatpush1.msra.mxu0 %v361
    %1078 = vmatprep.subr.mxu0 0.0
    %1079 = vmatpush1.msra.mxu0 %v368
    %1080 = vmatprep.subr.mxu0 0.0
    %1081 = vmatpush1.msra.mxu0 %v375
    %1082 = vmatprep.subr.mxu0 0.0
    %1083 = vmatpush1.msra.mxu0 %v382
    %1084 = vmatprep.subr.mxu0 0.0
    %1085 = vmatpush1.msra.mxu0 %v389
    %1086 = vmatprep.subr.mxu0 0.0
    %1087 = vmatpush1.msra.mxu0 %v396
    %1088 = vmatprep.subr.mxu0 0.0
    %1089 = vmatpush1.msra.mxu0 %v403
    %1090 = vmatprep.subr.mxu0 0.0
    %1091 = vmatpush1.msra.mxu0 %v410
    %1092 = vmatprep.subr.mxu0 0.0
    %1093 = vmatpush1.msra.mxu0 %v417
    %1094 = vmatprep.subr.mxu0 0.0
    %1095 = vmatpush1.msra.mxu0 %v424
    %1096 = vmatprep.subr.mxu0 0.0
    %1097 = vmatpush1.msra.mxu0 0.0
    %1098 = vmatprep.subr.mxu0 0.0
    %1099 = vmatpush1.msra.mxu0 0.0
    %1100 = vmatprep.subr.mxu0 0.0
    %1101 = vmatpush1.msra.mxu0 0.0
    %1102 = vmatprep.subr.mxu0 0.0
    %1103 = vmatpush1.msra.mxu0 0.0
    %1104 = vmatprep.subr.mxu0 0.0
    %1105 = vmatpush1.msra.mxu0 0.0
    %1106 = vmatprep.subr.mxu0 0.0
    %1107 = vmatpush1.msra.mxu0 0.0
    %1108 = vmatprep.subr.mxu0 0.0
    %1109 = vmatpush1.msra.mxu0 0.0
    %1110 = vmatprep.subr.mxu0 0.0
    %1111 = vmatpush1.msra.mxu0 0.0
    %1112 = vmatprep.subr.mxu0 0.0
    %1113 = vmatpush1.msra.mxu0 0.0
    %1114 = vmatprep.subr.mxu0 0.0
    %1115 = vmatpush1.msra.mxu0 0.0
    %1116 = vmatprep.subr.mxu0 0.0
    %1117 = vmatpush1.msra.mxu0 0.0
    %1118 = vmatprep.subr.mxu0 0.0
    %1119 = vmatpush1.msra.mxu0 0.0
    %1120 = vmatprep.subr.mxu0 0.0
    %1121 = vmatpush1.msra.mxu0 0.0
    %1122 = vmatprep.subr.mxu0 0.0
    %1123 = vmatpush1.msra.mxu0 0.0
    %1124 = vmatprep.subr.mxu0 0.0
    %1125 = vmatpush1.msra.mxu0 0.0
    %1126 = vmatprep.subr.mxu0 0.0
    %1127 = vmatpush1.msra.mxu0 0.0
    %1128 = vmatprep.mubr.f32.mxu0 0.0
    %1129 = vmatmul.mubr.f32.gmra.mrb[0].mxu0 %v427
    %v1130 = vpop.f32.mrb[0].mxu0
    %v1131 = vadd.f32 %v779, %v1130
    %v1132 = vpop.f32.mrb[0].mxu0
    %1133 = vmatprep.mubr.f32.mxu0 0.0
    %1134 = vmatmul.mubr.f32.gmra.mrb[0].mxu0 %v428
    %v1135 = vpop.f32.mrb[0].mxu0
    %v1136 = vadd.f32 %v784, %v1135
    %v1137 = vpop.f32.mrb[0].mxu0
    %1138 = vmatprep.mubr.f32.mxu0 0.0
    %1139 = vmatmul.mubr.f32.gmra.mrb[0].mxu0 %v429
    %v1140 = vpop.f32.mrb[0].mxu0
    %v1141 = vadd.f32 %v789, %v1140
    %v1142 = vpop.f32.mrb[0].mxu0
    %1143 = vmatprep.mubr.f32.mxu0 0.0
    %1144 = vmatmul.mubr.f32.gmra.mrb[0].mxu0 %v430
    %v1145 = vpop.f32.mrb[0].mxu0
    %v1146 = vadd.f32 %v794, %v1145
    %v1147 = vpop.f32.mrb[0].mxu0
    %1148 = vdwg.mxu0
    %1149 = vmatprep.subr.mxu0 %v314
    %1150 = vmatpush1.msra.mxu0 %v313
    %1151 = vmatprep.subr.mxu0 %v321
    %1152 = vmatpush1.msra.mxu0 %v320
    %1153 = vmatprep.subr.mxu0 %v328
    %1154 = vmatpush1.msra.mxu0 %v327
    %1155 = vmatprep.subr.mxu0 %v335
    %1156 = vmatpush1.msra.mxu0 %v334
    %1157 = vmatprep.subr.mxu0 %v342
    %1158 = vmatpush1.msra.mxu0 %v341
    %1159 = vmatprep.subr.mxu0 %v349
    %1160 = vmatpush1.msra.mxu0 %v348
    %1161 = vmatprep.subr.mxu0 %v356
    %1162 = vmatpush1.msra.mxu0 %v355
    %1163 = vmatprep.subr.mxu0 %v363
    %1164 = vmatpush1.msra.mxu0 %v362
    %1165 = vmatprep.subr.mxu0 %v370
    %1166 = vmatpush1.msra.mxu0 %v369
    %1167 = vmatprep.subr.mxu0 %v377
    %1168 = vmatpush1.msra.mxu0 %v376
    %1169 = vmatprep.subr.mxu0 %v384
    %1170 = vmatpush1.msra.mxu0 %v383
    %1171 = vmatprep.subr.mxu0 %v391
    %1172 = vmatpush1.msra.mxu0 %v390
    %1173 = vmatprep.subr.mxu0 %v398
    %1174 = vmatpush1.msra.mxu0 %v397
    %1175 = vmatprep.subr.mxu0 %v405
    %1176 = vmatpush1.msra.mxu0 %v404
    %1177 = vmatprep.subr.mxu0 %v412
    %1178 = vmatpush1.msra.mxu0 %v411
    %1179 = vmatprep.subr.mxu0 %v419
    %1180 = vmatpush1.msra.mxu0 %v418
    %1181 = vmatprep.subr.mxu0 0.0
    %1182 = vmatpush1.msra.mxu0 0.0
    %1183 = vmatprep.subr.mxu0 0.0
    %1184 = vmatpush1.msra.mxu0 0.0
    %1185 = vmatprep.subr.mxu0 0.0
    %1186 = vmatpush1.msra.mxu0 0.0
    %1187 = vmatprep.subr.mxu0 0.0
    %1188 = vmatpush1.msra.mxu0 0.0
    %1189 = vmatprep.subr.mxu0 0.0
    %1190 = vmatpush1.msra.mxu0 0.0
    %1191 = vmatprep.subr.mxu0 0.0
    %1192 = vmatpush1.msra.mxu0 0.0
    %1193 = vmatprep.subr.mxu0 0.0
    %1194 = vmatpush1.msra.mxu0 0.0
    %1195 = vmatprep.subr.mxu0 0.0
    %1196 = vmatpush1.msra.mxu0 0.0
    %1197 = vmatprep.subr.mxu0 0.0
    %1198 = vmatpush1.msra.mxu0 0.0
    %1199 = vmatprep.subr.mxu0 0.0
    %1200 = vmatpush1.msra.mxu0 0.0
    %1201 = vmatprep.subr.mxu0 0.0
    %1202 = vmatpush1.msra.mxu0 0.0
    %1203 = vmatprep.subr.mxu0 0.0
    %1204 = vmatpush1.msra.mxu0 0.0
    %1205 = vmatprep.subr.mxu0 0.0
    %1206 = vmatpush1.msra.mxu0 0.0
    %1207 = vmatprep.subr.mxu0 0.0
    %1208 = vmatpush1.msra.mxu0 0.0
    %1209 = vmatprep.subr.mxu0 0.0
    %1210 = vmatpush1.msra.mxu0 0.0
    %1211 = vmatprep.subr.mxu0 0.0
    %1212 = vmatpush1.msra.mxu0 0.0
    %1213 = vmatprep.mubr.f32.mxu0 0.0
    %1214 = vmatmul.mubr.f32.gmra.mrb[0].mxu0 %v441
    %v1215 = vpop.f32.mrb[0].mxu0
    %v1216 = vadd.f32 0.0, %v1215
    %v1217 = vpop.f32.mrb[0].mxu0
    %v1218 = vadd.f32 0.0, %v1217
    %1219 = vmatprep.mubr.f32.mxu0 0.0
    %1220 = vmatmul.mubr.f32.gmra.mrb[0].mxu0 %v442
    %v1221 = vpop.f32.mrb[0].mxu0
    %v1222 = vadd.f32 0.0, %v1221
    %v1223 = vpop.f32.mrb[0].mxu0
    %v1224 = vadd.f32 0.0, %v1223
    %1225 = vmatprep.mubr.f32.mxu0 0.0
    %1226 = vmatmul.mubr.f32.gmra.mrb[0].mxu0 %v443
    %v1227 = vpop.f32.mrb[0].mxu0
    %v1228 = vadd.f32 0.0, %v1227
    %v1229 = vpop.f32.mrb[0].mxu0
    %v1230 = vadd.f32 0.0, %v1229
    %1231 = vmatprep.mubr.f32.mxu0 0.0
    %1232 = vmatmul.mubr.f32.gmra.mrb[0].mxu0 %v444
    %v1233 = vpop.f32.mrb[0].mxu0
    %v1234 = vadd.f32 0.0, %v1233
    %v1235 = vpop.f32.mrb[0].mxu0
    %v1236 = vadd.f32 0.0, %v1235
    %1237 = vdwg.mxu0
    %1238 = vmatprep.subr.mxu0 %v316
    %1239 = vmatpush1.msra.mxu0 %v315
    %1240 = vmatprep.subr.mxu0 %v323
    %1241 = vmatpush1.msra.mxu0 %v322
    %1242 = vmatprep.subr.mxu0 %v330
    %1243 = vmatpush1.msra.mxu0 %v329
    %1244 = vmatprep.subr.mxu0 %v337
    %1245 = vmatpush1.msra.mxu0 %v336
    %1246 = vmatprep.subr.mxu0 %v344
    %1247 = vmatpush1.msra.mxu0 %v343
    %1248 = vmatprep.subr.mxu0 %v351
    %1249 = vmatpush1.msra.mxu0 %v350
    %1250 = vmatprep.subr.mxu0 %v358
    %1251 = vmatpush1.msra.mxu0 %v357
    %1252 = vmatprep.subr.mxu0 %v365
    %1253 = vmatpush1.msra.mxu0 %v364
    %1254 = vmatprep.subr.mxu0 %v372
    %1255 = vmatpush1.msra.mxu0 %v371
    %1256 = vmatprep.subr.mxu0 %v379
    %1257 = vmatpush1.msra.mxu0 %v378
    %1258 = vmatprep.subr.mxu0 %v386
    %1259 = vmatpush1.msra.mxu0 %v385
    %1260 = vmatprep.subr.mxu0 %v393
    %1261 = vmatpush1.msra.mxu0 %v392
    %1262 = vmatprep.subr.mxu0 %v400
    %1263 = vmatpush1.msra.mxu0 %v399
    %1264 = vmatprep.subr.mxu0 %v407
    %1265 = vmatpush1.msra.mxu0 %v406
    %1266 = vmatprep.subr.mxu0 %v414
    %1267 = vmatpush1.msra.mxu0 %v413
    %1268 = vmatprep.subr.mxu0 %v421
    %1269 = vmatpush1.msra.mxu0 %v420
    %1270 = vmatprep.subr.mxu0 0.0
    %1271 = vmatpush1.msra.mxu0 0.0
    %1272 = vmatprep.subr.mxu0 0.0
    %1273 = vmatpush1.msra.mxu0 0.0
    %1274 = vmatprep.subr.mxu0 0.0
    %1275 = vmatpush1.msra.mxu0 0.0
    %1276 = vmatprep.subr.mxu0 0.0
    %1277 = vmatpush1.msra.mxu0 0.0
    %1278 = vmatprep.subr.mxu0 0.0
    %1279 = vmatpush1.msra.mxu0 0.0
    %1280 = vmatprep.subr.mxu0 0.0
    %1281 = vmatpush1.msra.mxu0 0.0
    %1282 = vmatprep.subr.mxu0 0.0
    %1283 = vmatpush1.msra.mxu0 0.0
    %1284 = vmatprep.subr.mxu0 0.0
    %1285 = vmatpush1.msra.mxu0 0.0
    %1286 = vmatprep.subr.mxu0 0.0
    %1287 = vmatpush1.msra.mxu0 0.0
    %1288 = vmatprep.subr.mxu0 0.0
    %1289 = vmatpush1.msra.mxu0 0.0
    %1290 = vmatprep.subr.mxu0 0.0
    %1291 = vmatpush1.msra.mxu0 0.0
    %1292 = vmatprep.subr.mxu0 0.0
    %1293 = vmatpush1.msra.mxu0 0.0
    %1294 = vmatprep.subr.mxu0 0.0
    %1295 = vmatpush1.msra.mxu0 0.0
    %1296 = vmatprep.subr.mxu0 0.0
    %1297 = vmatpush1.msra.mxu0 0.0
    %1298 = vmatprep.subr.mxu0 0.0
    %1299 = vmatpush1.msra.mxu0 0.0
    %1300 = vmatprep.subr.mxu0 0.0
    %1301 = vmatpush1.msra.mxu0 0.0
    %1302 = vmatprep.mubr.f32.mxu0 0.0
    %1303 = vmatmul.mubr.f32.gmra.mrb[0].mxu0 %v441
    %v1304 = vpop.f32.mrb[0].mxu0
    %v1305 = vadd.f32 0.0, %v1304
    %v1306 = vpop.f32.mrb[0].mxu0
    %v1307 = vadd.f32 0.0, %v1306
    %1308 = vmatprep.mubr.f32.mxu0 0.0
    %1309 = vmatmul.mubr.f32.gmra.mrb[0].mxu0 %v442
    %v1310 = vpop.f32.mrb[0].mxu0
    %v1311 = vadd.f32 0.0, %v1310
    %v1312 = vpop.f32.mrb[0].mxu0
    %v1313 = vadd.f32 0.0, %v1312
    %1314 = vmatprep.mubr.f32.mxu0 0.0
    %1315 = vmatmul.mubr.f32.gmra.mrb[0].mxu0 %v443
    %v1316 = vpop.f32.mrb[0].mxu0
    %v1317 = vadd.f32 0.0, %v1316
    %v1318 = vpop.f32.mrb[0].mxu0
    %v1319 = vadd.f32 0.0, %v1318
    %1320 = vmatprep.mubr.f32.mxu0 0.0
    %1321 = vmatmul.mubr.f32.gmra.mrb[0].mxu0 %v444
    %v1322 = vpop.f32.mrb[0].mxu0
    %v1323 = vadd.f32 0.0, %v1322
    %v1324 = vpop.f32.mrb[0].mxu0
    %v1325 = vadd.f32 0.0, %v1324
    %1326 = vdwg.mxu0
    %1327 = vmatprep.subr.mxu0 %v318
    %1328 = vmatpush1.msra.mxu0 %v317
    %1329 = vmatprep.subr.mxu0 %v325
    %1330 = vmatpush1.msra.mxu0 %v324
    %1331 = vmatprep.subr.mxu0 %v332
    %1332 = vmatpush1.msra.mxu0 %v331
    %1333 = vmatprep.subr.mxu0 %v339
    %1334 = vmatpush1.msra.mxu0 %v338
    %1335 = vmatprep.subr.mxu0 %v346
    %1336 = vmatpush1.msra.mxu0 %v345
    %1337 = vmatprep.subr.mxu0 %v353
    %1338 = vmatpush1.msra.mxu0 %v352
    %1339 = vmatprep.subr.mxu0 %v360
    %1340 = vmatpush1.msra.mxu0 %v359
    %1341 = vmatprep.subr.mxu0 %v367
    %1342 = vmatpush1.msra.mxu0 %v366
    %1343 = vmatprep.subr.mxu0 %v374
    %1344 = vmatpush1.msra.mxu0 %v373
    %1345 = vmatprep.subr.mxu0 %v381
    %1346 = vmatpush1.msra.mxu0 %v380
    %1347 = vmatprep.subr.mxu0 %v388
    %1348 = vmatpush1.msra.mxu0 %v387
    %1349 = vmatprep.subr.mxu0 %v395
    %1350 = vmatpush1.msra.mxu0 %v394
    %1351 = vmatprep.subr.mxu0 %v402
    %1352 = vmatpush1.msra.mxu0 %v401
    %1353 = vmatprep.subr.mxu0 %v409
    %1354 = vmatpush1.msra.mxu0 %v408
    %1355 = vmatprep.subr.mxu0 %v416
    %1356 = vmatpush1.msra.mxu0 %v415
    %1357 = vmatprep.subr.mxu0 %v423
    %1358 = vmatpush1.msra.mxu0 %v422
    %1359 = vmatprep.subr.mxu0 0.0
    %1360 = vmatpush1.msra.mxu0 0.0
    %1361 = vmatprep.subr.mxu0 0.0
    %1362 = vmatpush1.msra.mxu0 0.0
    %1363 = vmatprep.subr.mxu0 0.0
    %1364 = vmatpush1.msra.mxu0 0.0
    %1365 = vmatprep.subr.mxu0 0.0
    %1366 = vmatpush1.msra.mxu0 0.0
    %1367 = vmatprep.subr.mxu0 0.0
    %1368 = vmatpush1.msra.mxu0 0.0
    %1369 = vmatprep.subr.mxu0 0.0
    %1370 = vmatpush1.msra.mxu0 0.0
    %1371 = vmatprep.subr.mxu0 0.0
    %1372 = vmatpush1.msra.mxu0 0.0
    %1373 = vmatprep.subr.mxu0 0.0
    %1374 = vmatpush1.msra.mxu0 0.0
    %1375 = vmatprep.subr.mxu0 0.0
    %1376 = vmatpush1.msra.mxu0 0.0
    %1377 = vmatprep.subr.mxu0 0.0
    %1378 = vmatpush1.msra.mxu0 0.0
    %1379 = vmatprep.subr.mxu0 0.0
    %1380 = vmatpush1.msra.mxu0 0.0
    %1381 = vmatprep.subr.mxu0 0.0
    %1382 = vmatpush1.msra.mxu0 0.0
    %1383 = vmatprep.subr.mxu0 0.0
    %1384 = vmatpush1.msra.mxu0 0.0
    %1385 = vmatprep.subr.mxu0 0.0
    %1386 = vmatpush1.msra.mxu0 0.0
    %1387 = vmatprep.subr.mxu0 0.0
    %1388 = vmatpush1.msra.mxu0 0.0
    %1389 = vmatprep.subr.mxu0 0.0
    %1390 = vmatpush1.msra.mxu0 0.0
    %1391 = vmatprep.mubr.f32.mxu0 0.0
    %1392 = vmatmul.mubr.f32.gmra.mrb[0].mxu0 %v441
    %v1393 = vpop.f32.mrb[0].mxu0
    %v1394 = vadd.f32 0.0, %v1393
    %v1395 = vpop.f32.mrb[0].mxu0
    %v1396 = vadd.f32 0.0, %v1395
    %1397 = vmatprep.mubr.f32.mxu0 0.0
    %1398 = vmatmul.mubr.f32.gmra.mrb[0].mxu0 %v442
    %v1399 = vpop.f32.mrb[0].mxu0
    %v1400 = vadd.f32 0.0, %v1399
    %v1401 = vpop.f32.mrb[0].mxu0
    %v1402 = vadd.f32 0.0, %v1401
    %1403 = vmatprep.mubr.f32.mxu0 0.0
    %1404 = vmatmul.mubr.f32.gmra.mrb[0].mxu0 %v443
    %v1405 = vpop.f32.mrb[0].mxu0
    %v1406 = vadd.f32 0.0, %v1405
    %v1407 = vpop.f32.mrb[0].mxu0
    %v1408 = vadd.f32 0.0, %v1407
    %1409 = vmatprep.mubr.f32.mxu0 0.0
    %1410 = vmatmul.mubr.f32.gmra.mrb[0].mxu0 %v444
    %v1411 = vpop.f32.mrb[0].mxu0
    %v1412 = vadd.f32 0.0, %v1411
    %v1413 = vpop.f32.mrb[0].mxu0
    %v1414 = vadd.f32 0.0, %v1413
    %1415 = vdwg.mxu0
    %1416 = vmatprep.subr.mxu0 0.0
    %1417 = vmatpush1.msra.mxu0 %v319
    %1418 = vmatprep.subr.mxu0 0.0
    %1419 = vmatpush1.msra.mxu0 %v326
    %1420 = vmatprep.subr.mxu0 0.0
    %1421 = vmatpush1.msra.mxu0 %v333
    %1422 = vmatprep.subr.mxu0 0.0
    %1423 = vmatpush1.msra.mxu0 %v340
    %1424 = vmatprep.subr.mxu0 0.0
    %1425 = vmatpush1.msra.mxu0 %v347
    %1426 = vmatprep.subr.mxu0 0.0
    %1427 = vmatpush1.msra.mxu0 %v354
    %1428 = vmatprep.subr.mxu0 0.0
    %1429 = vmatpush1.msra.mxu0 %v361
    %1430 = vmatprep.subr.mxu0 0.0
    %1431 = vmatpush1.msra.mxu0 %v368
    %1432 = vmatprep.subr.mxu0 0.0
    %1433 = vmatpush1.msra.mxu0 %v375
    %1434 = vmatprep.subr.mxu0 0.0
    %1435 = vmatpush1.msra.mxu0 %v382
    %1436 = vmatprep.subr.mxu0 0.0
    %1437 = vmatpush1.msra.mxu0 %v389
    %1438 = vmatprep.subr.mxu0 0.0
    %1439 = vmatpush1.msra.mxu0 %v396
    %1440 = vmatprep.subr.mxu0 0.0
    %1441 = vmatpush1.msra.mxu0 %v403
    %1442 = vmatprep.subr.mxu0 0.0
    %1443 = vmatpush1.msra.mxu0 %v410
    %1444 = vmatprep.subr.mxu0 0.0
    %1445 = vmatpush1.msra.mxu0 %v417
    %1446 = vmatprep.subr.mxu0 0.0
    %1447 = vmatpush1.msra.mxu0 %v424
    %1448 = vmatprep.subr.mxu0 0.0
    %1449 = vmatpush1.msra.mxu0 0.0
    %1450 = vmatprep.subr.mxu0 0.0
    %1451 = vmatpush1.msra.mxu0 0.0
    %1452 = vmatprep.subr.mxu0 0.0
    %1453 = vmatpush1.msra.mxu0 0.0
    %1454 = vmatprep.subr.mxu0 0.0
    %1455 = vmatpush1.msra.mxu0 0.0
    %1456 = vmatprep.subr.mxu0 0.0
    %1457 = vmatpush1.msra.mxu0 0.0
    %1458 = vmatprep.subr.mxu0 0.0
    %1459 = vmatpush1.msra.mxu0 0.0
    %1460 = vmatprep.subr.mxu0 0.0
    %1461 = vmatpush1.msra.mxu0 0.0
    %1462 = vmatprep.subr.mxu0 0.0
    %1463 = vmatpush1.msra.mxu0 0.0
    %1464 = vmatprep.subr.mxu0 0.0
    %1465 = vmatpush1.msra.mxu0 0.0
    %1466 = vmatprep.subr.mxu0 0.0
    %1467 = vmatpush1.msra.mxu0 0.0
    %1468 = vmatprep.subr.mxu0 0.0
    %1469 = vmatpush1.msra.mxu0 0.0
    %1470 = vmatprep.subr.mxu0 0.0
    %1471 = vmatpush1.msra.mxu0 0.0
    %1472 = vmatprep.subr.mxu0 0.0
    %1473 = vmatpush1.msra.mxu0 0.0
    %1474 = vmatprep.subr.mxu0 0.0
    %1475 = vmatpush1.msra.mxu0 0.0
    %1476 = vmatprep.subr.mxu0 0.0
    %1477 = vmatpush1.msra.mxu0 0.0
    %1478 = vmatprep.subr.mxu0 0.0
    %1479 = vmatpush1.msra.mxu0 0.0
    %1480 = vmatprep.mubr.f32.mxu0 0.0
    %1481 = vmatmul.mubr.f32.gmra.mrb[0].mxu0 %v441
    %v1482 = vpop.f32.mrb[0].mxu0
    %v1483 = vadd.f32 0.0, %v1482
    %v1484 = vpop.f32.mrb[0].mxu0
    %1485 = vmatprep.mubr.f32.mxu0 0.0
    %1486 = vmatmul.mubr.f32.gmra.mrb[0].mxu0 %v442
    %v1487 = vpop.f32.mrb[0].mxu0
    %v1488 = vadd.f32 0.0, %v1487
    %v1489 = vpop.f32.mrb[0].mxu0
    %1490 = vmatprep.mubr.f32.mxu0 0.0
    %1491 = vmatmul.mubr.f32.gmra.mrb[0].mxu0 %v443
    %v1492 = vpop.f32.mrb[0].mxu0
    %v1493 = vadd.f32 0.0, %v1492
    %v1494 = vpop.f32.mrb[0].mxu0
    %1495 = vmatprep.mubr.f32.mxu0 0.0
    %1496 = vmatmul.mubr.f32.gmra.mrb[0].mxu0 %v444
    %v1497 = vpop.f32.mrb[0].mxu0
    %v1498 = vadd.f32 0.0, %v1497
    %v1499 = vpop.f32.mrb[0].mxu0
    %1500 = vdwg.mxu0
    %v1501 = vadd.f32 %v864, %v1216
    %v1502 = vadd.f32 %v866, %v1218
    %v1503 = vadd.f32 %v953, %v1305
    %v1504 = vadd.f32 %v955, %v1307
    %v1505 = vadd.f32 %v1042, %v1394
    %v1506 = vadd.f32 %v1044, %v1396
    %v1507 = vadd.f32 %v1131, %v1483
    %v1508 = vadd.f32 %v870, %v1222
    %v1509 = vadd.f32 %v872, %v1224
    %v1510 = vadd.f32 %v959, %v1311
    %v1511 = vadd.f32 %v961, %v1313
    %v1512 = vadd.f32 %v1048, %v1400
    %v1513 = vadd.f32 %v1050, %v1402
    %v1514 = vadd.f32 %v1136, %v1488
    %v1515 = vadd.f32 %v876, %v1228
    %v1516 = vadd.f32 %v878, %v1230
    %v1517 = vadd.f32 %v965, %v1317
    %v1518 = vadd.f32 %v967, %v1319
    %v1519 = vadd.f32 %v1054, %v1406
    %v1520 = vadd.f32 %v1056, %v1408
    %v1521 = vadd.f32 %v1141, %v1493
    %v1522 = vadd.f32 %v882, %v1234
    %v1523 = vadd.f32 %v884, %v1236
    %v1524 = vadd.f32 %v971, %v1323
    %v1525 = vadd.f32 %v973, %v1325
    %v1526 = vadd.f32 %v1060, %v1412
    %v1527 = vadd.f32 %v1062, %v1414
    %v1528 = vadd.f32 %v1146, %v1498
    %v1529 = vmul.f32 %v281, %v1501
    %v1530 = vmul.f32 %v282, %v1502
    %v1531 = vmul.f32 %v283, %v1503
    %v1532 = vmul.f32 %v284, %v1504
    %v1533 = vmul.f32 %v285, %v1505
    %v1534 = vmul.f32 %v286, %v1506
    %v1535 = vmul.f32 %v287, %v1507
    %v1536 = vmul.f32 %v288, %v1508
    %v1537 = vmul.f32 %v289, %v1509
    %v1538 = vmul.f32 %v290, %v1510
    %v1539 = vmul.f32 %v291, %v1511
    %v1540 = vmul.f32 %v292, %v1512
    %v1541 = vmul.f32 %v293, %v1513
    %v1542 = vmul.f32 %v294, %v1514
    %v1543 = vmul.f32 %v295, %v1515
    %v1544 = vmul.f32 %v296, %v1516
    %v1545 = vmul.f32 %v297, %v1517
    %v1546 = vmul.f32 %v298, %v1518
    %v1547 = vmul.f32 %v299, %v1519
    %v1548 = vmul.f32 %v300, %v1520
    %v1549 = vmul.f32 %v301, %v1521
    %v1550 = vmul.f32 %v302, %v1522
    %v1551 = vmul.f32 %v303, %v1523
    %v1552 = vmul.f32 %v304, %v1524
    %v1553 = vmul.f32 %v305, %v1525
    %v1554 = vmul.f32 %v306, %v1526
    %v1555 = vmul.f32 %v307, %v1527
    %v1556 = vmul.f32 %v308, %v1528
    %1557 = vst [vmem:[#allocation10] sm:$0xff] %v1529
    %1558 = vst [vmem:[#allocation10 + $0x8] sm:$0xff] %v1530
    %1559 = vst [vmem:[#allocation10 + $0x10] sm:$0xff] %v1531
    %1560 = vst [vmem:[#allocation10 + $0x18] sm:$0xff] %v1532
    %1561 = vst [vmem:[#allocation10 + $0x20] sm:$0xff] %v1533
    %1562 = vst [vmem:[#allocation10 + $0x28] sm:$0xff] %v1534
    %1563 = vst [vmem:[#allocation10 + $0x30] sm:$0xff] %v1535
    %1564 = vst [vmem:[#allocation10 + $0x38] sm:$0xff] %v1536
    %1565 = vst [vmem:[#allocation10 + $0x40] sm:$0xff] %v1537
    %1566 = vst [vmem:[#allocation10 + $0x48] sm:$0xff] %v1538
    %1567 = vst [vmem:[#allocation10 + $0x50] sm:$0xff] %v1539
    %1568 = vst [vmem:[#allocation10 + $0x58] sm:$0xff] %v1540
    %1569 = vst [vmem:[#allocation10 + $0x60] sm:$0xff] %v1541
    %1570 = vst [vmem:[#allocation10 + $0x68] sm:$0xff] %v1542
    %1571 = vst [vmem:[#allocation10 + $0x70] sm:$0xff] %v1543
    %1572 = vst [vmem:[#allocation10 + $0x78] sm:$0xff] %v1544
    %1573 = vst [vmem:[#allocation10 + $0x80] sm:$0xff] %v1545
    %1574 = vst [vmem:[#allocation10 + $0x88] sm:$0xff] %v1546
    %1575 = vst [vmem:[#allocation10 + $0x90] sm:$0xff] %v1547
    %1576 = vst [vmem:[#allocation10 + $0x98] sm:$0xff] %v1548
    %1577 = vst [vmem:[#allocation10 + $0xa0] sm:$0xff] %v1549
    %1578 = vst [vmem:[#allocation10 + $0xa8] sm:$0xff] %v1550
    %1579 = vst [vmem:[#allocation10 + $0xb0] sm:$0xff] %v1551
    %1580 = vst [vmem:[#allocation10 + $0xb8] sm:$0xff] %v1552
    %1581 = vst [vmem:[#allocation10 + $0xc0] sm:$0xff] %v1553
    %1582 = vst [vmem:[#allocation10 + $0xc8] sm:$0xff] %v1554
    %1583 = vst [vmem:[#allocation10 + $0xd0] sm:$0xff] %v1555
    %1584 = vst [vmem:[#allocation10 + $0xd8] sm:$0xff] %v1556
    // Predicated region
    $region38: #{tpu_custom_call.1} parent=1 // pred_check
      _
    $region39: #{tpu_custom_call.1} parent=1 // pred_check_branch
      %1586 = sbr.rel (0) target = $region41
    $region40: #{tpu_custom_call.1} parent=1 // pred_region
      %s1588 = ssub.s32 3584, 3584
      %1589 = vsyncadd [#allocation4], %s1588
      %s1590 = sshll.u32 [#allocation10], 4
      %s1591 = int_to_ptr.vmem [resolvable:$true] %s1590
      %1596 = dma.vmem_to_hbm [thread:$0]  %s1591, 3584, %s5, [#allocation4], 896, 896, 56
    $region41: #{tpu_custom_call.1} parent=1 // pred_fallthru
      _
    // Predicated region
    $region42: #{tpu_custom_call.1} parent=1 // pred_check
      _
    $region43: #{tpu_custom_call.1} parent=1 // pred_check_branch
      %1598 = sbr.rel (0) target = $region45
    $region44: #{tpu_custom_call.1} parent=1 // pred_region
      %1599 = dma.done [#allocation4], 3584
    $region45: #{tpu_custom_call.1} parent=1 // pred_fallthru
      _
    %1600 = vsyncpa [#allocation3], 1
    %1601 = vsyncpa [#allocation6], 1
    %1602 = vsyncpa [#allocation9], 1
    %1603 = vsyncpa [#allocation4], 1

</llo_original>
